<compile_context>
chip_gen: v7x
topology: tpu7x:2x2x1
jax: 0.10.0
libtpu: 0.0.40
codegen_flags: <defaults>
</compile_context>

<pallas_src>
import functools
import math

import jax
import jax.numpy as jnp
from jax.experimental import pallas as pl
from jax.experimental.pallas import tpu as pltpu


def _qk_map(x):
    # elu(x) + 1 == where(x > 0, x + 1, exp(x)); clamp exp arg to avoid inf on the dead branch.
    return jnp.where(x > 0, x + 1.0, jnp.exp(jnp.minimum(x, 0.0)))


def _ln_packed(x, win_mask, g, b, inv_c, eps=1e-5):
    """Per-window LayerNorm in the lane-packed layout.

    win_mask is a [PC, PC] bf16 block-diagonal mask (1 where two lanes belong to the same
    window), so the mask matmuls return per-window sums already broadcast back across that
    window's lanes — everything stays 128-lane dense.
    """
    bf16 = jnp.bfloat16
    mu = jnp.dot(x.astype(bf16), win_mask, preferred_element_type=jnp.float32) * inv_c
    xc = x - mu
    var = jnp.dot((xc * xc).astype(bf16), win_mask, preferred_element_type=jnp.float32) * inv_c
    return xc * jax.lax.rsqrt(var + eps) * g + b


def _encoder_body(x3, src3, wq_ref, wkv_ref, wm_ref, hm_ref, lm_ref,
                  g1_ref, b1_ref, w1a_ref, w1b_ref, w2_ref, g2_ref, b2_ref,
                  o_ref, *, inv_c, eps):
    TB, L, PC = x3.shape
    S = src3.shape[1]
    bf16 = jnp.bfloat16

    x2 = x3.reshape(TB * L, PC)                 # row-batched, lane-packed slabs
    src2 = src3.reshape(TB * S, PC)
    hm = hm_ref[...]                            # [PC, PC] bf16, same-head mask (constant input)
    lm = lm_ref[...]                            # [PC, PC] bf16, same-window mask (constant input)

    # Projections: y = x @ W (weights pre-transposed, block-diag over packed windows, bf16).
    q2 = jnp.dot(x2.astype(bf16), wq_ref[...], preferred_element_type=jnp.float32)    # [R, PC]
    kv2 = jnp.dot(src2.astype(bf16), wkv_ref[...], preferred_element_type=jnp.float32)  # [R, 2PC]

    Q2 = _qk_map(q2)
    K2 = _qk_map(kv2[:, :PC])
    V2 = kv2[:, PC:]                            # no 1/S: it cancels exactly with the *S output scale.

    Q3 = Q2.reshape(TB, L, PC)
    K3 = K2.reshape(TB, S, PC)
    V3 = V2.reshape(TB, S, PC)

    # Linear attention: KV = K^T V per window/head as full-width batched matmuls; cross-head /
    # cross-window products are zeroed by the constant block-diagonal mask applied on the bf16
    # copy of KV (single pass).
    # TODO(synk): if vxpose shows on the critical path, restructure the S-axis contraction so
    # the transpose lands on the smaller operand.
    kv = jnp.einsum('bsc,bsd->bcd', K3.astype(bf16), V3.astype(bf16),
                    preferred_element_type=jnp.float32)           # [TB, PC, PC]
    kv_bf = kv.astype(bf16) * hm[None]
    attn = jnp.einsum('blc,bcd->bld', Q3.astype(bf16), kv_bf,
                      preferred_element_type=jnp.float32)         # [TB, L, PC]

    ksum = jnp.sum(K3, axis=1)                                    # [TB, PC]
    num = (Q3 * ksum[:, None, :]).reshape(TB * L, PC)
    zden = jnp.dot(num.astype(bf16), hm, preferred_element_type=jnp.float32)  # per-head sums, bcast
    inv_z = pl.reciprocal(zden + eps, approx=False)

    message = attn.reshape(TB * L, PC) * inv_z

    # merge + norm1
    message = jnp.dot(message.astype(bf16), wm_ref[...], preferred_element_type=jnp.float32)
    message = _ln_packed(message, lm, g1_ref[...], b1_ref[...], inv_c)

    # MLP on concat([x, message]) without the lane concat: hid = relu(x@w1a + msg@w1b).
    hid = jnp.dot(x2.astype(bf16), w1a_ref[...], preferred_element_type=jnp.float32)
    hid = hid + jnp.dot(message.astype(bf16), w1b_ref[...], preferred_element_type=jnp.float32)
    hid = jnp.maximum(hid, 0.0)
    out = jnp.dot(hid.astype(bf16), w2_ref[...], preferred_element_type=jnp.float32)
    out = _ln_packed(out, lm, g2_ref[...], b2_ref[...], inv_c)

    o_ref[...] = (x2 + out).reshape(TB, L, PC)


def encoder_kernel_cross(x_ref, src_ref, wq_ref, wkv_ref, wm_ref, hm_ref, lm_ref,
                         g1_ref, b1_ref, w1a_ref, w1b_ref, w2_ref, g2_ref, b2_ref,
                         o_ref, *, inv_c, eps=1e-6):
    _encoder_body(x_ref[...], src_ref[...], wq_ref, wkv_ref, wm_ref, hm_ref, lm_ref,
                  g1_ref, b1_ref, w1a_ref, w1b_ref, w2_ref, g2_ref, b2_ref,
                  o_ref, inv_c=inv_c, eps=eps)


def encoder_kernel_self(x_ref, wq_ref, wkv_ref, wm_ref, hm_ref, lm_ref,
                        g1_ref, b1_ref, w1a_ref, w1b_ref, w2_ref, g2_ref, b2_ref,
                        o_ref, *, inv_c, eps=1e-6):
    x3 = x_ref[...]   # self-attention: reuse the single DMA'd block for both x and source
    _encoder_body(x3, x3, wq_ref, wkv_ref, wm_ref, hm_ref, lm_ref,
                  g1_ref, b1_ref, w1a_ref, w1b_ref, w2_ref, g2_ref, b2_ref,
                  o_ref, inv_c=inv_c, eps=eps)


def _full_spec(shape):
    nd = len(shape)
    return pl.BlockSpec(shape, lambda b, _nd=nd: (0,) * _nd)


_WEIGHT_KEYS = ("wq", "wkv", "wm", "hm", "lm", "g1", "b1", "w1a", "w1b", "w2", "g2", "b2")


def encoder_layer_packed(xp, srcp, params, *, is_self, tbp_target=32):
    """One EncoderLayer on lane-packed features xp:[Np, L, PC], srcp:[Np, S, PC]."""
    Np, L, PC = xp.shape
    if is_self:
        srcp = xp
    S = srcp.shape[1]

    # Fewer/larger grid steps: each step handles tbp packed groups (= tbp*pack windows,
    # tbp*L rows of 128 lanes).  On v7x one may prefer an even >=2-step grid for its 2 TCs;
    # on 1-TC chips the largest tile that fits VMEM wins.
    tbp = max(1, min(tbp_target, Np))
    pad = (-Np) % tbp
    if pad:
        xp = jnp.pad(xp, ((0, pad), (0, 0), (0, 0)))
        if not is_self:
            srcp = jnp.pad(srcp, ((0, pad), (0, 0), (0, 0)))
    nb = (Np + pad) // tbp

    weights = [params[k] for k in _WEIGHT_KEYS]
    weight_specs = [_full_spec(params[k].shape) for k in _WEIGHT_KEYS]
    inv_c = 1.0 / float(PC // params["pack"])

    x_spec = pl.BlockSpec((tbp, L, PC), lambda b: (b, 0, 0))
    out_spec = pl.BlockSpec((tbp, L, PC), lambda b: (b, 0, 0))

    if is_self:
        kernel = functools.partial(encoder_kernel_self, inv_c=inv_c)
        in_specs = [x_spec] + weight_specs
        operands = (xp, *weights)
    else:
        src_spec = pl.BlockSpec((tbp, S, PC), lambda b: (b, 0, 0))
        kernel = functools.partial(encoder_kernel_cross, inv_c=inv_c)
        in_specs = [x_spec, src_spec] + weight_specs
        operands = (xp, srcp, *weights)

    out = pl.pallas_call(
        kernel,
        out_shape=jax.ShapeDtypeStruct((Np + pad, L, PC), jnp.float32),
        grid=(nb,),
        in_specs=in_specs,
        out_specs=out_spec,
        compiler_params=pltpu.CompilerParams(
            dimension_semantics=("parallel",),
            vmem_limit_bytes=64 * 1024 * 1024),
    )(*operands)

    return out[:Np] if pad else out


# ---------------------------------------------------------------------------
# Window packing / parameter preparation (host side, outside the kernel).
# ---------------------------------------------------------------------------

def pack_windows(x, pack):
    """[N, L, C] -> [ceil(N/pack), L, pack*C]: `pack` windows side-by-side on the lane axis."""
    N, L, C = x.shape
    pad = (-N) % pack
    if pad:
        x = jnp.pad(x, ((0, pad), (0, 0), (0, 0)))
    Np = (N + pad) // pack
    return x.reshape(Np, pack, L, C).transpose(0, 2, 1, 3).reshape(Np, L, pack * C)


def unpack_windows(xp, pack, n, c):
    Np, L, _ = xp.shape
    x = xp.reshape(Np, L, pack, c).transpose(0, 2, 1, 3).reshape(Np * pack, L, c)
    return x[:n]


def _block_diag(w, p):
    a, b = w.shape
    out = jnp.zeros((p * a, p * b), w.dtype)
    for i in range(p):
        out = out.at[i * a:(i + 1) * a, i * b:(i + 1) * b].set(w)
    return out


def _xavier_uniform(key, fan_in, fan_out):
    # NOTE: stored pre-transposed vs. PyTorch nn.Linear (shape [fan_in, fan_out], y = x @ W).
    bound = math.sqrt(6.0 / (fan_in + fan_out))
    return jax.random.uniform(key, (fan_in, fan_out), jnp.float32, -bound, bound)


def init_layer_params(key, d_model):
    ks = jax.random.split(key, 6)
    return {
        "wq": _xavier_uniform(ks[0], d_model, d_model),
        "wk": _xavier_uniform(ks[1], d_model, d_model),
        "wv": _xavier_uniform(ks[2], d_model, d_model),
        "wm": _xavier_uniform(ks[3], d_model, d_model),
        "g1": jnp.ones((1, d_model), jnp.float32),
        "b1": jnp.zeros((1, d_model), jnp.float32),
        "w1": _xavier_uniform(ks[4], 2 * d_model, 2 * d_model),
        "w2": _xavier_uniform(ks[5], 2 * d_model, d_model),
        "g2": jnp.ones((1, d_model), jnp.float32),
        "b2": jnp.zeros((1, d_model), jnp.float32),
    }


def prepare_layer_params(raw, nhead, pack=2):
    """Block-diagonalize weights over `pack` lane-packed windows, fuse k|v, split the first
    MLP weight, build the constant head/window masks, and cast matmul weights to bf16."""
    C = raw["wq"].shape[0]
    PC = pack * C
    D = C // nhead
    bf16 = jnp.bfloat16
    bd = lambda w: _block_diag(w, pack)
    lane = jnp.arange(PC)
    head_mask = (lane[:, None] // D == lane[None, :] // D).astype(bf16)  # same head (=> same window)
    win_mask = (lane[:, None] // C == lane[None, :] // C).astype(bf16)   # same window (LayerNorm)
    return {
        "pack": pack,
        "wq": bd(raw["wq"]).astype(bf16),
        "wkv": jnp.concatenate([bd(raw["wk"]), bd(raw["wv"])], axis=1).astype(bf16),  # [PC, 2PC]
        "wm": bd(raw["wm"]).astype(bf16),
        "hm": head_mask,
        "lm": win_mask,
        "g1": jnp.tile(raw["g1"], (1, pack)), "b1": jnp.tile(raw["b1"], (1, pack)),
        "w1a": bd(raw["w1"][:C]).astype(bf16),   # multiplies x
        "w1b": bd(raw["w1"][C:]).astype(bf16),   # multiplies message
        "w2": bd(raw["w2"]).astype(bf16),        # [2PC, PC]
        "g2": jnp.tile(raw["g2"], (1, pack)), "b2": jnp.tile(raw["b2"], (1, pack)),
    }


def local_fine_feature_transformer(feat0, feat1, layers_params, layer_names):
    pack = layers_params[0]["pack"]
    n0, _, c = feat0.shape
    n1 = feat1.shape[0]
    if "cross" in layer_names:
        assert n0 == n1, "cross layers pair window i of feat0 with window i of feat1"

    f0 = pack_windows(feat0, pack)
    f1 = pack_windows(feat1, pack)
    for params, name in zip(layers_params, layer_names):
        if name == "self":
            f0 = encoder_layer_packed(f0, None, params, is_self=True)
            f1 = encoder_layer_packed(f1, None, params, is_self=True)
        elif name == "cross":
            f0_new = encoder_layer_packed(f0, f1, params, is_self=False)
            f1 = encoder_layer_packed(f1, f0_new, params, is_self=False)
            f0 = f0_new
        else:
            raise KeyError(name)
    return unpack_windows(f0, pack, n0, c), unpack_windows(f1, pack, n1, c)


if __name__ == "__main__":
    config = {
        "d_model": 64,
        "nhead": 4,
        "layer_names": ["self", "cross"],
        "attention": "linear",
    }

    N, L, S, C = 8, 8, 16, config["d_model"]
    PACK = 2   # 128-lane packing; PACK=4 gives 256-wide operands for v6e/v7x MXUs.

    key = jax.random.PRNGKey(0)
    k0, k1, kp = jax.random.split(key, 3)
    feat0 = jax.random.normal(k0, (N, L, C), jnp.float32)
    feat1 = jax.random.normal(k1, (N, S, C), jnp.float32)

    layer_keys = jax.random.split(kp, len(config["layer_names"]))
    layers_params = [prepare_layer_params(init_layer_params(k, C), config["nhead"], PACK)
                     for k in layer_keys]

    out0, out1 = local_fine_feature_transformer(
        feat0, feat1, layers_params, config["layer_names"])
    jax.block_until_ready((out0, out1))

    assert out0.shape == (N, L, C) and out1.shape == (N, S, C)
    assert bool(jnp.all(jnp.isfinite(out0))) and bool(jnp.all(jnp.isfinite(out1)))
    print("KERNEL_OK")
</pallas_src>

<mosaic_0001>
module attributes {stable_mosaic.version = 11 : i64} {
  func.func @encoder_kernel_self(%arg0: i32, %arg1: memref<4x8x128xf32, #tpu.memory_space<vmem>>, %arg2: memref<128x128xbf16, #tpu.memory_space<vmem>>, %arg3: memref<128x256xbf16, #tpu.memory_space<vmem>>, %arg4: memref<128x128xbf16, #tpu.memory_space<vmem>>, %arg5: memref<128x128xbf16, #tpu.memory_space<vmem>>, %arg6: memref<128x128xbf16, #tpu.memory_space<vmem>>, %arg7: memref<1x128xf32, #tpu.memory_space<vmem>>, %arg8: memref<1x128xf32, #tpu.memory_space<vmem>>, %arg9: memref<128x256xbf16, #tpu.memory_space<vmem>>, %arg10: memref<128x256xbf16, #tpu.memory_space<vmem>>, %arg11: memref<256x128xbf16, #tpu.memory_space<vmem>>, %arg12: memref<1x128xf32, #tpu.memory_space<vmem>>, %arg13: memref<1x128xf32, #tpu.memory_space<vmem>>, %arg14: memref<4x8x128xf32, #tpu.memory_space<vmem>>) attributes {dimension_semantics = [#tpu.dimension_semantics<parallel>], iteration_bounds = array<i64: 1>, scalar_prefetch = 0 : i64, scratch_operands = 0 : i64, tpu.core_type = #tpu.core_type<tc>, window_params = [{transform_indices = @transform_0, window_bounds = array<i64: 4, 8, 128>}, {pipeline_mode = #tpu.pipeline_mode<synchronous>, transform_indices = @transform_1, window_bounds = array<i64: 128, 128>}, {pipeline_mode = #tpu.pipeline_mode<synchronous>, transform_indices = @transform_2, window_bounds = array<i64: 128, 256>}, {pipeline_mode = #tpu.pipeline_mode<synchronous>, transform_indices = @transform_3, window_bounds = array<i64: 128, 128>}, {pipeline_mode = #tpu.pipeline_mode<synchronous>, transform_indices = @transform_4, window_bounds = array<i64: 128, 128>}, {pipeline_mode = #tpu.pipeline_mode<synchronous>, transform_indices = @transform_5, window_bounds = array<i64: 128, 128>}, {pipeline_mode = #tpu.pipeline_mode<synchronous>, transform_indices = @transform_6, window_bounds = array<i64: 1, 128>}, {pipeline_mode = #tpu.pipeline_mode<synchronous>, transform_indices = @transform_7, window_bounds = array<i64: 1, 128>}, {pipeline_mode = #tpu.pipeline_mode<synchronous>, transform_indices = @transform_8, window_bounds = array<i64: 128, 256>}, {pipeline_mode = #tpu.pipeline_mode<synchronous>, transform_indices = @transform_9, window_bounds = array<i64: 128, 256>}, {pipeline_mode = #tpu.pipeline_mode<synchronous>, transform_indices = @transform_10, window_bounds = array<i64: 256, 128>}, {pipeline_mode = #tpu.pipeline_mode<synchronous>, transform_indices = @transform_11, window_bounds = array<i64: 1, 128>}, {pipeline_mode = #tpu.pipeline_mode<synchronous>, transform_indices = @transform_12, window_bounds = array<i64: 1, 128>}, {transform_indices = @transform_13, window_bounds = array<i64: 4, 8, 128>}]} {
    %c0 = arith.constant 0 : index
    %c0_0 = arith.constant 0 : index
    %c0_1 = arith.constant 0 : index
    %0 = vector.load %arg1[%c0, %c0_0, %c0_1] : memref<4x8x128xf32, #tpu.memory_space<vmem>>, vector<4x8x128xf32>
    %1 = vector.shape_cast %0 : vector<4x8x128xf32> to vector<32x128xf32>
    %2 = vector.shape_cast %0 : vector<4x8x128xf32> to vector<32x128xf32>
    %c0_2 = arith.constant 0 : index
    %c0_3 = arith.constant 0 : index
    %3 = vector.load %arg5[%c0_2, %c0_3] : memref<128x128xbf16, #tpu.memory_space<vmem>>, vector<128x128xbf16>
    %c0_4 = arith.constant 0 : index
    %c0_5 = arith.constant 0 : index
    %4 = vector.load %arg6[%c0_4, %c0_5] : memref<128x128xbf16, #tpu.memory_space<vmem>>, vector<128x128xbf16>
    %5 = arith.truncf %1 : vector<32x128xf32> to vector<32x128xbf16>
    %c0_6 = arith.constant 0 : index
    %c0_7 = arith.constant 0 : index
    %6 = vector.load %arg2[%c0_6, %c0_7] : memref<128x128xbf16, #tpu.memory_space<vmem>>, vector<128x128xbf16>
    %cst = arith.constant dense<0.000000e+00> : vector<32x128xf32>
    %7 = tpu.matmul %5, %6, %cst {dimension_numbers = #tpu.dot_dimension_numbers<[1], [0], [0], [1], [0, 0, 1, 1], [], []>} : vector<32x128xbf16>, vector<128x128xbf16>, vector<32x128xf32> -> vector<32x128xf32>
    %8 = arith.truncf %2 : vector<32x128xf32> to vector<32x128xbf16>
    %c0_8 = arith.constant 0 : index
    %c0_9 = arith.constant 0 : index
    %9 = vector.load %arg3[%c0_8, %c0_9] : memref<128x256xbf16, #tpu.memory_space<vmem>>, vector<128x256xbf16>
    %cst_10 = arith.constant dense<0.000000e+00> : vector<32x256xf32>
    %10 = tpu.matmul %8, %9, %cst_10 {dimension_numbers = #tpu.dot_dimension_numbers<[1], [0], [0], [1], [0, 0, 1, 1], [], []>} : vector<32x128xbf16>, vector<128x256xbf16>, vector<32x256xf32> -> vector<32x256xf32>
    %cst_11 = arith.constant 0.000000e+00 : f32
    %11 = vector.broadcast %cst_11 : f32 to vector<32x128xf32>
    %12 = arith.cmpf ogt, %7, %11 : vector<32x128xf32>
    %cst_12 = arith.constant 1.000000e+00 : f32
    %13 = vector.broadcast %cst_12 : f32 to vector<32x128xf32>
    %14 = arith.addf %7, %13 : vector<32x128xf32>
    %cst_13 = arith.constant 0.000000e+00 : f32
    %15 = vector.broadcast %cst_13 : f32 to vector<32x128xf32>
    %16 = arith.minimumf %7, %15 : vector<32x128xf32>
    %17 = math.exp %16 : vector<32x128xf32>
    %18 = arith.select %12, %14, %17 : vector<32x128xi1>, vector<32x128xf32>
    %19 = vector.extract_strided_slice %10 {offsets = [0, 0], sizes = [32, 128], strides = [1, 1]} : vector<32x256xf32> to vector<32x128xf32>
    %cst_14 = arith.constant 0.000000e+00 : f32
    %20 = vector.broadcast %cst_14 : f32 to vector<32x128xf32>
    %21 = arith.cmpf ogt, %19, %20 : vector<32x128xf32>
    %cst_15 = arith.constant 1.000000e+00 : f32
    %22 = vector.broadcast %cst_15 : f32 to vector<32x128xf32>
    %23 = arith.addf %19, %22 : vector<32x128xf32>
    %cst_16 = arith.constant 0.000000e+00 : f32
    %24 = vector.broadcast %cst_16 : f32 to vector<32x128xf32>
    %25 = arith.minimumf %19, %24 : vector<32x128xf32>
    %26 = math.exp %25 : vector<32x128xf32>
    %27 = arith.select %21, %23, %26 : vector<32x128xi1>, vector<32x128xf32>
    %28 = vector.extract_strided_slice %10 {offsets = [0, 128], sizes = [32, 128], strides = [1, 1]} : vector<32x256xf32> to vector<32x128xf32>
    %29 = vector.shape_cast %18 : vector<32x128xf32> to vector<4x8x128xf32>
    %30 = vector.shape_cast %27 : vector<32x128xf32> to vector<4x8x128xf32>
    %31 = vector.shape_cast %28 : vector<32x128xf32> to vector<4x8x128xf32>
    %32 = arith.truncf %30 : vector<4x8x128xf32> to vector<4x8x128xbf16>
    %33 = arith.truncf %31 : vector<4x8x128xf32> to vector<4x8x128xbf16>
    "tpu.trace_start"() <{level = 10 : i32, message = "bsc,bsd->bcd"}> : () -> ()
    %cst_17 = arith.constant dense<0.000000e+00> : vector<4x128x128xf32>
    %34 = tpu.matmul %32, %33, %cst_17 {dimension_numbers = #tpu.dot_dimension_numbers<[1], [1], [2], [2], [0, 0, 0, 2, 1, 2], [0], [0]>} : vector<4x8x128xbf16>, vector<4x8x128xbf16>, vector<4x128x128xf32> -> vector<4x128x128xf32>
    "tpu.trace_stop"() : () -> ()
    %35 = arith.truncf %34 : vector<4x128x128xf32> to vector<4x128x128xbf16>
    %36 = vector.shape_cast %3 : vector<128x128xbf16> to vector<1x128x128xbf16>
    %37 = vector.broadcast %36 : vector<1x128x128xbf16> to vector<4x128x128xbf16>
    %38 = arith.mulf %35, %37 : vector<4x128x128xbf16>
    %39 = arith.truncf %29 : vector<4x8x128xf32> to vector<4x8x128xbf16>
    "tpu.trace_start"() <{level = 10 : i32, message = "blc,bcd->bld"}> : () -> ()
    %cst_18 = arith.constant dense<0.000000e+00> : vector<4x8x128xf32>
    %40 = tpu.matmul %39, %38, %cst_18 {dimension_numbers = #tpu.dot_dimension_numbers<[2], [1], [1], [2], [0, 0, 0, 1, 1, 2], [0], [0]>} : vector<4x8x128xbf16>, vector<4x128x128xbf16>, vector<4x8x128xf32> -> vector<4x8x128xf32>
    "tpu.trace_stop"() : () -> ()
    %cst_19 = arith.constant dense<0.000000e+00> : vector<4x128xf32>
    %41 = vector.multi_reduction <add>, %30, %cst_19 [1] : vector<4x8x128xf32> to vector<4x128xf32>
    %42 = vector.shape_cast %41 : vector<4x128xf32> to vector<4x1x128xf32>
    %43 = vector.broadcast %42 : vector<4x1x128xf32> to vector<4x8x128xf32>
    %44 = arith.mulf %29, %43 : vector<4x8x128xf32>
    %45 = vector.shape_cast %44 : vector<4x8x128xf32> to vector<32x128xf32>
    %46 = arith.truncf %45 : vector<32x128xf32> to vector<32x128xbf16>
    %cst_20 = arith.constant dense<0.000000e+00> : vector<32x128xf32>
    %47 = tpu.matmul %46, %3, %cst_20 {dimension_numbers = #tpu.dot_dimension_numbers<[1], [0], [0], [1], [0, 0, 1, 1], [], []>} : vector<32x128xbf16>, vector<128x128xbf16>, vector<32x128xf32> -> vector<32x128xf32>
    %cst_21 = arith.constant 9.99999997E-7 : f32
    %48 = vector.broadcast %cst_21 : f32 to vector<32x128xf32>
    %49 = arith.addf %47, %48 : vector<32x128xf32>
    %50 = tpu.reciprocal %49 : vector<32x128xf32> -> vector<32x128xf32>
    %51 = vector.shape_cast %40 : vector<4x8x128xf32> to vector<32x128xf32>
    %52 = arith.mulf %51, %50 : vector<32x128xf32>
    %53 = arith.truncf %52 : vector<32x128xf32> to vector<32x128xbf16>
    %c0_22 = arith.constant 0 : index
    %c0_23 = arith.constant 0 : index
    %54 = vector.load %arg4[%c0_22, %c0_23] : memref<128x128xbf16, #tpu.memory_space<vmem>>, vector<128x128xbf16>
    %cst_24 = arith.constant dense<0.000000e+00> : vector<32x128xf32>
    %55 = tpu.matmul %53, %54, %cst_24 {dimension_numbers = #tpu.dot_dimension_numbers<[1], [0], [0], [1], [0, 0, 1, 1], [], []>} : vector<32x128xbf16>, vector<128x128xbf16>, vector<32x128xf32> -> vector<32x128xf32>
    %c0_25 = arith.constant 0 : index
    %c0_26 = arith.constant 0 : index
    %56 = vector.load %arg7[%c0_25, %c0_26] : memref<1x128xf32, #tpu.memory_space<vmem>>, vector<1x128xf32>
    %c0_27 = arith.constant 0 : index
    %c0_28 = arith.constant 0 : index
    %57 = vector.load %arg8[%c0_27, %c0_28] : memref<1x128xf32, #tpu.memory_space<vmem>>, vector<1x128xf32>
    %58 = arith.truncf %55 : vector<32x128xf32> to vector<32x128xbf16>
    %cst_29 = arith.constant dense<0.000000e+00> : vector<32x128xf32>
    %59 = tpu.matmul %58, %4, %cst_29 {dimension_numbers = #tpu.dot_dimension_numbers<[1], [0], [0], [1], [0, 0, 1, 1], [], []>} : vector<32x128xbf16>, vector<128x128xbf16>, vector<32x128xf32> -> vector<32x128xf32>
    %cst_30 = arith.constant 1.562500e-02 : f32
    %60 = vector.broadcast %cst_30 : f32 to vector<32x128xf32>
    %61 = arith.mulf %59, %60 : vector<32x128xf32>
    %62 = arith.subf %55, %61 : vector<32x128xf32>
    %63 = arith.mulf %62, %62 : vector<32x128xf32>
    %64 = arith.truncf %63 : vector<32x128xf32> to vector<32x128xbf16>
    %cst_31 = arith.constant dense<0.000000e+00> : vector<32x128xf32>
    %65 = tpu.matmul %64, %4, %cst_31 {dimension_numbers = #tpu.dot_dimension_numbers<[1], [0], [0], [1], [0, 0, 1, 1], [], []>} : vector<32x128xbf16>, vector<128x128xbf16>, vector<32x128xf32> -> vector<32x128xf32>
    %cst_32 = arith.constant 1.562500e-02 : f32
    %66 = vector.broadcast %cst_32 : f32 to vector<32x128xf32>
    %67 = arith.mulf %65, %66 : vector<32x128xf32>
    %cst_33 = arith.constant 9.99999974E-6 : f32
    %68 = vector.broadcast %cst_33 : f32 to vector<32x128xf32>
    %69 = arith.addf %67, %68 : vector<32x128xf32>
    %70 = math.rsqrt %69 : vector<32x128xf32>
    %71 = arith.mulf %62, %70 : vector<32x128xf32>
    %72 = vector.broadcast %56 : vector<1x128xf32> to vector<32x128xf32>
    %73 = arith.mulf %71, %72 : vector<32x128xf32>
    %74 = vector.broadcast %57 : vector<1x128xf32> to vector<32x128xf32>
    %75 = arith.addf %73, %74 : vector<32x128xf32>
    %76 = arith.truncf %1 : vector<32x128xf32> to vector<32x128xbf16>
    %c0_34 = arith.constant 0 : index
    %c0_35 = arith.constant 0 : index
    %77 = vector.load %arg9[%c0_34, %c0_35] : memref<128x256xbf16, #tpu.memory_space<vmem>>, vector<128x256xbf16>
    %cst_36 = arith.constant dense<0.000000e+00> : vector<32x256xf32>
    %78 = tpu.matmul %76, %77, %cst_36 {dimension_numbers = #tpu.dot_dimension_numbers<[1], [0], [0], [1], [0, 0, 1, 1], [], []>} : vector<32x128xbf16>, vector<128x256xbf16>, vector<32x256xf32> -> vector<32x256xf32>
    %79 = arith.truncf %75 : vector<32x128xf32> to vector<32x128xbf16>
    %c0_37 = arith.constant 0 : index
    %c0_38 = arith.constant 0 : index
    %80 = vector.load %arg10[%c0_37, %c0_38] : memref<128x256xbf16, #tpu.memory_space<vmem>>, vector<128x256xbf16>
    %cst_39 = arith.constant dense<0.000000e+00> : vector<32x256xf32>
    %81 = tpu.matmul %79, %80, %cst_39 {dimension_numbers = #tpu.dot_dimension_numbers<[1], [0], [0], [1], [0, 0, 1, 1], [], []>} : vector<32x128xbf16>, vector<128x256xbf16>, vector<32x256xf32> -> vector<32x256xf32>
    %82 = arith.addf %78, %81 : vector<32x256xf32>
    %cst_40 = arith.constant 0.000000e+00 : f32
    %83 = vector.broadcast %cst_40 : f32 to vector<32x256xf32>
    %84 = arith.maximumf %82, %83 : vector<32x256xf32>
    %85 = arith.truncf %84 : vector<32x256xf32> to vector<32x256xbf16>
    %c0_41 = arith.constant 0 : index
    %c0_42 = arith.constant 0 : index
    %86 = vector.load %arg11[%c0_41, %c0_42] : memref<256x128xbf16, #tpu.memory_space<vmem>>, vector<256x128xbf16>
    %cst_43 = arith.constant dense<0.000000e+00> : vector<32x128xf32>
    %87 = tpu.matmul %85, %86, %cst_43 {dimension_numbers = #tpu.dot_dimension_numbers<[1], [0], [0], [1], [0, 0, 1, 1], [], []>} : vector<32x256xbf16>, vector<256x128xbf16>, vector<32x128xf32> -> vector<32x128xf32>
    %c0_44 = arith.constant 0 : index
    %c0_45 = arith.constant 0 : index
    %88 = vector.load %arg12[%c0_44, %c0_45] : memref<1x128xf32, #tpu.memory_space<vmem>>, vector<1x128xf32>
    %c0_46 = arith.constant 0 : index
    %c0_47 = arith.constant 0 : index
    %89 = vector.load %arg13[%c0_46, %c0_47] : memref<1x128xf32, #tpu.memory_space<vmem>>, vector<1x128xf32>
    %90 = arith.truncf %87 : vector<32x128xf32> to vector<32x128xbf16>
    %cst_48 = arith.constant dense<0.000000e+00> : vector<32x128xf32>
    %91 = tpu.matmul %90, %4, %cst_48 {dimension_numbers = #tpu.dot_dimension_numbers<[1], [0], [0], [1], [0, 0, 1, 1], [], []>} : vector<32x128xbf16>, vector<128x128xbf16>, vector<32x128xf32> -> vector<32x128xf32>
    %cst_49 = arith.constant 1.562500e-02 : f32
    %92 = vector.broadcast %cst_49 : f32 to vector<32x128xf32>
    %93 = arith.mulf %91, %92 : vector<32x128xf32>
    %94 = arith.subf %87, %93 : vector<32x128xf32>
    %95 = arith.mulf %94, %94 : vector<32x128xf32>
    %96 = arith.truncf %95 : vector<32x128xf32> to vector<32x128xbf16>
    %cst_50 = arith.constant dense<0.000000e+00> : vector<32x128xf32>
    %97 = tpu.matmul %96, %4, %cst_50 {dimension_numbers = #tpu.dot_dimension_numbers<[1], [0], [0], [1], [0, 0, 1, 1], [], []>} : vector<32x128xbf16>, vector<128x128xbf16>, vector<32x128xf32> -> vector<32x128xf32>
    %cst_51 = arith.constant 1.562500e-02 : f32
    %98 = vector.broadcast %cst_51 : f32 to vector<32x128xf32>
    %99 = arith.mulf %97, %98 : vector<32x128xf32>
    %cst_52 = arith.constant 9.99999974E-6 : f32
    %100 = vector.broadcast %cst_52 : f32 to vector<32x128xf32>
    %101 = arith.addf %99, %100 : vector<32x128xf32>
    %102 = math.rsqrt %101 : vector<32x128xf32>
    %103 = arith.mulf %94, %102 : vector<32x128xf32>
    %104 = vector.broadcast %88 : vector<1x128xf32> to vector<32x128xf32>
    %105 = arith.mulf %103, %104 : vector<32x128xf32>
    %106 = vector.broadcast %89 : vector<1x128xf32> to vector<32x128xf32>
    %107 = arith.addf %105, %106 : vector<32x128xf32>
    %108 = arith.addf %1, %107 : vector<32x128xf32>
    %109 = vector.shape_cast %108 : vector<32x128xf32> to vector<4x8x128xf32>
    %c0_53 = arith.constant 0 : index
    %c0_54 = arith.constant 0 : index
    %c0_55 = arith.constant 0 : index
    %110 = vector.load %arg14[%c0_53, %c0_54, %c0_55] : memref<4x8x128xf32, #tpu.memory_space<vmem>>, vector<4x8x128xf32>
    tpu.vector_store %arg14[%c0_53, %c0_54, %c0_55], %109 {strides = array<i32>} : memref<4x8x128xf32, #tpu.memory_space<vmem>>, vector<4x8x128xf32>,
    return
  }
  func.func @transform_0(%arg0: i32) -> (i32, i32, i32) {
    %c0_i32 = arith.constant 0 : i32
    %c0_i32_0 = arith.constant 0 : i32
    %c0_i32_1 = arith.constant 0 : i32
    return %arg0, %c0_i32, %c0_i32_0 : i32, i32, i32
  }
  func.func @transform_1(%arg0: i32) -> (i32, i32) {
    %c0_i32 = arith.constant 0 : i32
    %c0_i32_0 = arith.constant 0 : i32
    %c0_i32_1 = arith.constant 0 : i32
    return %c0_i32, %c0_i32_0 : i32, i32
  }
  func.func @transform_2(%arg0: i32) -> (i32, i32) {
    %c0_i32 = arith.constant 0 : i32
    %c0_i32_0 = arith.constant 0 : i32
    %c0_i32_1 = arith.constant 0 : i32
    return %c0_i32, %c0_i32_0 : i32, i32
  }
  func.func @transform_3(%arg0: i32) -> (i32, i32) {
    %c0_i32 = arith.constant 0 : i32
    %c0_i32_0 = arith.constant 0 : i32
    %c0_i32_1 = arith.constant 0 : i32
    return %c0_i32, %c0_i32_0 : i32, i32
  }
  func.func @transform_4(%arg0: i32) -> (i32, i32) {
    %c0_i32 = arith.constant 0 : i32
    %c0_i32_0 = arith.constant 0 : i32
    %c0_i32_1 = arith.constant 0 : i32
    return %c0_i32, %c0_i32_0 : i32, i32
  }
  func.func @transform_5(%arg0: i32) -> (i32, i32) {
    %c0_i32 = arith.constant 0 : i32
    %c0_i32_0 = arith.constant 0 : i32
    %c0_i32_1 = arith.constant 0 : i32
    return %c0_i32, %c0_i32_0 : i32, i32
  }
  func.func @transform_6(%arg0: i32) -> (i32, i32) {
    %c0_i32 = arith.constant 0 : i32
    %c0_i32_0 = arith.constant 0 : i32
    %c0_i32_1 = arith.constant 0 : i32
    return %c0_i32, %c0_i32_0 : i32, i32
  }
  func.func @transform_7(%arg0: i32) -> (i32, i32) {
    %c0_i32 = arith.constant 0 : i32
    %c0_i32_0 = arith.constant 0 : i32
    %c0_i32_1 = arith.constant 0 : i32
    return %c0_i32, %c0_i32_0 : i32, i32
  }
  func.func @transform_8(%arg0: i32) -> (i32, i32) {
    %c0_i32 = arith.constant 0 : i32
    %c0_i32_0 = arith.constant 0 : i32
    %c0_i32_1 = arith.constant 0 : i32
    return %c0_i32, %c0_i32_0 : i32, i32
  }
  func.func @transform_9(%arg0: i32) -> (i32, i32) {
    %c0_i32 = arith.constant 0 : i32
    %c0_i32_0 = arith.constant 0 : i32
    %c0_i32_1 = arith.constant 0 : i32
    return %c0_i32, %c0_i32_0 : i32, i32
  }
  func.func @transform_10(%arg0: i32) -> (i32, i32) {
    %c0_i32 = arith.constant 0 : i32
    %c0_i32_0 = arith.constant 0 : i32
    %c0_i32_1 = arith.constant 0 : i32
    return %c0_i32, %c0_i32_0 : i32, i32
  }
  func.func @transform_11(%arg0: i32) -> (i32, i32) {
    %c0_i32 = arith.constant 0 : i32
    %c0_i32_0 = arith.constant 0 : i32
    %c0_i32_1 = arith.constant 0 : i32
    return %c0_i32, %c0_i32_0 : i32, i32
  }
  func.func @transform_12(%arg0: i32) -> (i32, i32) {
    %c0_i32 = arith.constant 0 : i32
    %c0_i32_0 = arith.constant 0 : i32
    %c0_i32_1 = arith.constant 0 : i32
    return %c0_i32, %c0_i32_0 : i32, i32
  }
  func.func @transform_13(%arg0: i32) -> (i32, i32, i32) {
    %c0_i32 = arith.constant 0 : i32
    %c0_i32_0 = arith.constant 0 : i32
    %c0_i32_1 = arith.constant 0 : i32
    return %arg0, %c0_i32, %c0_i32_0 : i32, i32, i32
  }
}

</mosaic_0001>

<llo_original>
// kernel: tpu_custom_call.1
$region0: #{tpu_custom_call.1}
  #allocation0 [shape = 'u32[]', space=smem, size = 0x4, offset = 0x4, fixed_abs, tag = 'smem constant byte address 0x4 - core index']
  #allocation1 [shape = 'u32[144,128]{1,0:T(1,128)}', space=vmem, size = 0x12000, scoped, tag = 'internal scratch']
  %s0 = inlined_call_operand.hbm [shape: f32[4,8,128], index: 0, kind: input, shape index: {}]
  %s1 = inlined_call_operand.hbm [shape: bf16[128,128], index: 1, kind: input, shape index: {}]
  %s2 = inlined_call_operand.hbm [shape: bf16[128,256], index: 2, kind: input, shape index: {}]
  %s3 = inlined_call_operand.hbm [shape: bf16[128,128], index: 3, kind: input, shape index: {}]
  %s4 = inlined_call_operand.hbm [shape: bf16[128,128], index: 4, kind: input, shape index: {}]
  %s5 = inlined_call_operand.hbm [shape: bf16[128,128], index: 5, kind: input, shape index: {}]
  %s6 = inlined_call_operand.hbm [shape: f32[1,128], index: 6, kind: input, shape index: {}]
  %s7 = inlined_call_operand.hbm [shape: f32[1,128], index: 7, kind: input, shape index: {}]
  %s8 = inlined_call_operand.hbm [shape: bf16[128,256], index: 8, kind: input, shape index: {}]
  %s9 = inlined_call_operand.hbm [shape: bf16[128,256], index: 9, kind: input, shape index: {}]
  %s10 = inlined_call_operand.hbm [shape: bf16[256,128], index: 10, kind: input, shape index: {}]
  %s11 = inlined_call_operand.hbm [shape: f32[1,128], index: 11, kind: input, shape index: {}]
  %s12 = inlined_call_operand.hbm [shape: f32[1,128], index: 12, kind: input, shape index: {}]
  %s13 = inlined_call_operand.hbm [shape: f32[4,8,128], index: 13, kind: output, shape index: {}]
  %s14 = sld [smem:[#allocation0]]
  $region114: #{tpu_custom_call.1} parent=0
    _
  %s16 = ssub.s32 1, %s14
  %s17 = scalar_select 0, %s16, %s14
  $region1: #{tpu_custom_call.1} parent=0
    #allocation2 [shape = 'u8[16384]{0}', space=vmem, size = 0x4000, scoped, tag = 'input window, operand 0, single buffered']
    #allocation3 [shape = 's32[1]{0}', space=sflag, size = 0x4, scoped, tag = 'scoped memory for tpu_custom_call.1']
    #allocation4 [shape = 's32[1]{0}', space=sflag, size = 0x4, scoped, tag = 'scoped memory for tpu_custom_call.1']
    #allocation5 [shape = 'u8[32768]{0}', space=vmem, size = 0x8000, scoped, tag = 'input window, operand 1, single buffered']
    #allocation6 [shape = 's32[1]{0}', space=sflag, size = 0x4, scoped, tag = 'scoped memory for tpu_custom_call.1']
    #allocation7 [shape = 'u8[65536]{0}', space=vmem, size = 0x10000, scoped, tag = 'input window, operand 2, single buffered']
    #allocation8 [shape = 'u8[32768]{0}', space=vmem, size = 0x8000, scoped, tag = 'input window, operand 3, single buffered']
    #allocation9 [shape = 's32[1]{0}', space=sflag, size = 0x4, scoped, tag = 'scoped memory for tpu_custom_call.1']
    #allocation10 [shape = 'u8[32768]{0}', space=vmem, size = 0x8000, scoped, tag = 'input window, operand 4, single buffered']
    #allocation11 [shape = 'u8[32768]{0}', space=vmem, size = 0x8000, scoped, tag = 'input window, operand 5, single buffered']
    #allocation12 [shape = 's32[1]{0}', space=sflag, size = 0x4, scoped, tag = 'scoped memory for tpu_custom_call.1']
    #allocation13 [shape = 'u8[512]{0}', space=vmem, size = 0x400, scoped, tag = 'input window, operand 6, single buffered']
    #allocation14 [shape = 'u8[512]{0}', space=vmem, size = 0x400, scoped, tag = 'input window, operand 7, single buffered']
    #allocation15 [shape = 's32[1]{0}', space=sflag, size = 0x4, scoped, tag = 'scoped memory for tpu_custom_call.1']
    #allocation16 [shape = 'u8[65536]{0}', space=vmem, size = 0x10000, scoped, tag = 'input window, operand 8, single buffered']
    #allocation17 [shape = 'u8[65536]{0}', space=vmem, size = 0x10000, scoped, tag = 'input window, operand 9, single buffered']
    #allocation18 [shape = 's32[1]{0}', space=sflag, size = 0x4, scoped, tag = 'scoped memory for tpu_custom_call.1']
    #allocation19 [shape = 'u8[65536]{0}', space=vmem, size = 0x10000, scoped, tag = 'input window, operand 10, single buffered']
    #allocation20 [shape = 'u8[512]{0}', space=vmem, size = 0x400, scoped, tag = 'input window, operand 11, single buffered']
    #allocation21 [shape = 's32[1]{0}', space=sflag, size = 0x4, scoped, tag = 'scoped memory for tpu_custom_call.1']
    #allocation22 [shape = 'u8[512]{0}', space=vmem, size = 0x400, scoped, tag = 'input window, operand 12, single buffered']
    #allocation23 [shape = 'u8[16384]{0}', space=vmem, size = 0x4000, scoped, tag = 'output window, operand 0, single buffered']
    %18 = vsyncpa [#allocation3], 0
    %19 = vsyncpa [#allocation6], 0
    %20 = vsyncpa [#allocation9], 0
    %21 = vsyncpa [#allocation12], 0
    %22 = vsyncpa [#allocation15], 0
    %23 = vsyncpa [#allocation18], 0
    %24 = vsyncpa [#allocation21], 0
    %25 = vsyncpa [#allocation4], 0
    // Predicated region
    $region2: #{tpu_custom_call.1} parent=1 // pred_check
      _
    $region3: #{tpu_custom_call.1} parent=1 // pred_check_branch
      %27 = sbr.rel (0) target = $region5
    $region4: #{tpu_custom_call.1} parent=1 // pred_region
      %s29 = ssub.s32 512, 512
      %30 = vsyncadd [#allocation3], %s29
      %s31 = sshll.u32 [#allocation2], 4
      %s32 = int_to_ptr.vmem [resolvable:$true] %s31
      %37 = dma.hbm_to_vmem [thread:$0]  %s0, 512, %s32, [#allocation3], 128, 128, 8
    $region5: #{tpu_custom_call.1} parent=1 // pred_fallthru
      _
    // Predicated region
    $region6: #{tpu_custom_call.1} parent=1 // pred_check
      _
    $region7: #{tpu_custom_call.1} parent=1 // pred_check_branch
      %39 = sbr.rel (0) target = $region9
    $region8: #{tpu_custom_call.1} parent=1 // pred_region
      %s41 = ssub.s32 1024, 1024
      %42 = vsyncadd [#allocation6], %s41
      %s43 = sshll.u32 [#allocation5], 4
      %s44 = int_to_ptr.vmem [resolvable:$true] %s43
      %49 = dma.hbm_to_vmem [thread:$0]  %s1, 1024, %s44, [#allocation6], 64, 64, 4
    $region9: #{tpu_custom_call.1} parent=1 // pred_fallthru
      _
    // Predicated region
    $region10: #{tpu_custom_call.1} parent=1 // pred_check
      _
    $region11: #{tpu_custom_call.1} parent=1 // pred_check_branch
      %51 = sbr.rel (0) target = $region13
    $region12: #{tpu_custom_call.1} parent=1 // pred_region
      %s53 = ssub.s32 2048, 2048
      %54 = vsyncadd [#allocation6], %s53
      %s55 = sshll.u32 [#allocation7], 4
      %s56 = int_to_ptr.vmem [resolvable:$true] %s55
      %61 = dma.hbm_to_vmem [thread:$0]  %s2, 2048, %s56, [#allocation6], 128, 128, 8
    $region13: #{tpu_custom_call.1} parent=1 // pred_fallthru
      _
    // Predicated region
    $region14: #{tpu_custom_call.1} parent=1 // pred_check
      _
    $region15: #{tpu_custom_call.1} parent=1 // pred_check_branch
      %63 = sbr.rel (0) target = $region17
    $region16: #{tpu_custom_call.1} parent=1 // pred_region
      %s65 = ssub.s32 1024, 1024
      %66 = vsyncadd [#allocation9], %s65
      %s67 = sshll.u32 [#allocation8], 4
      %s68 = int_to_ptr.vmem [resolvable:$true] %s67
      %73 = dma.hbm_to_vmem [thread:$0]  %s3, 1024, %s68, [#allocation9], 64, 64, 4
    $region17: #{tpu_custom_call.1} parent=1 // pred_fallthru
      _
    // Predicated region
    $region18: #{tpu_custom_call.1} parent=1 // pred_check
      _
    $region19: #{tpu_custom_call.1} parent=1 // pred_check_branch
      %75 = sbr.rel (0) target = $region21
    $region20: #{tpu_custom_call.1} parent=1 // pred_region
      %s77 = ssub.s32 1024, 1024
      %78 = vsyncadd [#allocation9], %s77
      %s79 = sshll.u32 [#allocation10], 4
      %s80 = int_to_ptr.vmem [resolvable:$true] %s79
      %85 = dma.hbm_to_vmem [thread:$0]  %s4, 1024, %s80, [#allocation9], 64, 64, 4
    $region21: #{tpu_custom_call.1} parent=1 // pred_fallthru
      _
    // Predicated region
    $region22: #{tpu_custom_call.1} parent=1 // pred_check
      _
    $region23: #{tpu_custom_call.1} parent=1 // pred_check_branch
      %87 = sbr.rel (0) target = $region25
    $region24: #{tpu_custom_call.1} parent=1 // pred_region
      %s89 = ssub.s32 1024, 1024
      %90 = vsyncadd [#allocation12], %s89
      %s91 = sshll.u32 [#allocation11], 4
      %s92 = int_to_ptr.vmem [resolvable:$true] %s91
      %97 = dma.hbm_to_vmem [thread:$0]  %s5, 1024, %s92, [#allocation12], 64, 64, 4
    $region25: #{tpu_custom_call.1} parent=1 // pred_fallthru
      _
    // Predicated region
    $region26: #{tpu_custom_call.1} parent=1 // pred_check
      _
    $region27: #{tpu_custom_call.1} parent=1 // pred_check_branch
      %99 = sbr.rel (0) target = $region29
    $region28: #{tpu_custom_call.1} parent=1 // pred_region
      %s101 = ssub.s32 16, 16
      %102 = vsyncadd [#allocation12], %s101
      %s104 = sshll.u32 [#allocation13], 4
      %s105 = int_to_ptr.vmem [resolvable:$true] %s104
      %107 = dma.hbm_to_vmem [thread:$0]  %s6, 16, %s105, [#allocation12]
    $region29: #{tpu_custom_call.1} parent=1 // pred_fallthru
      _
    // Predicated region
    $region30: #{tpu_custom_call.1} parent=1 // pred_check
      _
    $region31: #{tpu_custom_call.1} parent=1 // pred_check_branch
      %109 = sbr.rel (0) target = $region33
    $region32: #{tpu_custom_call.1} parent=1 // pred_region
      %s111 = ssub.s32 16, 16
      %112 = vsyncadd [#allocation15], %s111
      %s114 = sshll.u32 [#allocation14], 4
      %s115 = int_to_ptr.vmem [resolvable:$true] %s114
      %117 = dma.hbm_to_vmem [thread:$0]  %s7, 16, %s115, [#allocation15]
    $region33: #{tpu_custom_call.1} parent=1 // pred_fallthru
      _
    // Predicated region
    $region34: #{tpu_custom_call.1} parent=1 // pred_check
      _
    $region35: #{tpu_custom_call.1} parent=1 // pred_check_branch
      %119 = sbr.rel (0) target = $region37
    $region36: #{tpu_custom_call.1} parent=1 // pred_region
      %s121 = ssub.s32 2048, 2048
      %122 = vsyncadd [#allocation15], %s121
      %s123 = sshll.u32 [#allocation16], 4
      %s124 = int_to_ptr.vmem [resolvable:$true] %s123
      %129 = dma.hbm_to_vmem [thread:$0]  %s8, 2048, %s124, [#allocation15], 128, 128, 8
    $region37: #{tpu_custom_call.1} parent=1 // pred_fallthru
      _
    // Predicated region
    $region38: #{tpu_custom_call.1} parent=1 // pred_check
      _
    $region39: #{tpu_custom_call.1} parent=1 // pred_check_branch
      %131 = sbr.rel (0) target = $region41
    $region40: #{tpu_custom_call.1} parent=1 // pred_region
      %s133 = ssub.s32 2048, 2048
      %134 = vsyncadd [#allocation18], %s133
      %s135 = sshll.u32 [#allocation17], 4
      %s136 = int_to_ptr.vmem [resolvable:$true] %s135
      %141 = dma.hbm_to_vmem [thread:$0]  %s9, 2048, %s136, [#allocation18], 128, 128, 8
    $region41: #{tpu_custom_call.1} parent=1 // pred_fallthru
      _
    // Predicated region
    $region42: #{tpu_custom_call.1} parent=1 // pred_check
      _
    $region43: #{tpu_custom_call.1} parent=1 // pred_check_branch
      %143 = sbr.rel (0) target = $region45
    $region44: #{tpu_custom_call.1} parent=1 // pred_region
      %s145 = ssub.s32 2048, 2048
      %146 = vsyncadd [#allocation18], %s145
      %s147 = sshll.u32 [#allocation19], 4
      %s148 = int_to_ptr.vmem [resolvable:$true] %s147
      %153 = dma.hbm_to_vmem [thread:$0]  %s10, 2048, %s148, [#allocation18], 64, 64, 4
    $region45: #{tpu_custom_call.1} parent=1 // pred_fallthru
      _
    // Predicated region
    $region46: #{tpu_custom_call.1} parent=1 // pred_check
      _
    $region47: #{tpu_custom_call.1} parent=1 // pred_check_branch
      %155 = sbr.rel (0) target = $region49
    $region48: #{tpu_custom_call.1} parent=1 // pred_region
      %s157 = ssub.s32 16, 16
      %158 = vsyncadd [#allocation21], %s157
      %s160 = sshll.u32 [#allocation20], 4
      %s161 = int_to_ptr.vmem [resolvable:$true] %s160
      %163 = dma.hbm_to_vmem [thread:$0]  %s11, 16, %s161, [#allocation21]
    $region49: #{tpu_custom_call.1} parent=1 // pred_fallthru
      _
    // Predicated region
    $region50: #{tpu_custom_call.1} parent=1 // pred_check
      _
    $region51: #{tpu_custom_call.1} parent=1 // pred_check_branch
      %165 = sbr.rel (0) target = $region53
    $region52: #{tpu_custom_call.1} parent=1 // pred_region
      %s167 = ssub.s32 16, 16
      %168 = vsyncadd [#allocation21], %s167
      %s170 = sshll.u32 [#allocation22], 4
      %s171 = int_to_ptr.vmem [resolvable:$true] %s170
      %173 = dma.hbm_to_vmem [thread:$0]  %s12, 16, %s171, [#allocation21]
    $region53: #{tpu_custom_call.1} parent=1 // pred_fallthru
      _
    // Predicated region
    $region54: #{tpu_custom_call.1} parent=1 // pred_check
      _
    $region55: #{tpu_custom_call.1} parent=1 // pred_check_branch
      %175 = sbr.rel (0) target = $region57
    $region56: #{tpu_custom_call.1} parent=1 // pred_region
      %176 = dma.done [#allocation3], 512
    $region57: #{tpu_custom_call.1} parent=1 // pred_fallthru
      _
    // Predicated region
    $region58: #{tpu_custom_call.1} parent=1 // pred_check
      _
    $region59: #{tpu_custom_call.1} parent=1 // pred_check_branch
      %178 = sbr.rel (0) target = $region61
    $region60: #{tpu_custom_call.1} parent=1 // pred_region
      %179 = dma.done [#allocation6], 1024
    $region61: #{tpu_custom_call.1} parent=1 // pred_fallthru
      _
    // Predicated region
    $region62: #{tpu_custom_call.1} parent=1 // pred_check
      _
    $region63: #{tpu_custom_call.1} parent=1 // pred_check_branch
      %181 = sbr.rel (0) target = $region65
    $region64: #{tpu_custom_call.1} parent=1 // pred_region
      %182 = dma.done [#allocation6], 2048
    $region65: #{tpu_custom_call.1} parent=1 // pred_fallthru
      _
    // Predicated region
    $region66: #{tpu_custom_call.1} parent=1 // pred_check
      _
    $region67: #{tpu_custom_call.1} parent=1 // pred_check_branch
      %184 = sbr.rel (0) target = $region69
    $region68: #{tpu_custom_call.1} parent=1 // pred_region
      %185 = dma.done [#allocation9], 1024
    $region69: #{tpu_custom_call.1} parent=1 // pred_fallthru
      _
    // Predicated region
    $region70: #{tpu_custom_call.1} parent=1 // pred_check
      _
    $region71: #{tpu_custom_call.1} parent=1 // pred_check_branch
      %187 = sbr.rel (0) target = $region73
    $region72: #{tpu_custom_call.1} parent=1 // pred_region
      %188 = dma.done [#allocation9], 1024
    $region73: #{tpu_custom_call.1} parent=1 // pred_fallthru
      _
    // Predicated region
    $region74: #{tpu_custom_call.1} parent=1 // pred_check
      _
    $region75: #{tpu_custom_call.1} parent=1 // pred_check_branch
      %190 = sbr.rel (0) target = $region77
    $region76: #{tpu_custom_call.1} parent=1 // pred_region
      %191 = dma.done [#allocation12], 1024
    $region77: #{tpu_custom_call.1} parent=1 // pred_fallthru
      _
    // Predicated region
    $region78: #{tpu_custom_call.1} parent=1 // pred_check
      _
    $region79: #{tpu_custom_call.1} parent=1 // pred_check_branch
      %193 = sbr.rel (0) target = $region81
    $region80: #{tpu_custom_call.1} parent=1 // pred_region
      %194 = dma.done [#allocation12], 16
    $region81: #{tpu_custom_call.1} parent=1 // pred_fallthru
      _
    // Predicated region
    $region82: #{tpu_custom_call.1} parent=1 // pred_check
      _
    $region83: #{tpu_custom_call.1} parent=1 // pred_check_branch
      %196 = sbr.rel (0) target = $region85
    $region84: #{tpu_custom_call.1} parent=1 // pred_region
      %197 = dma.done [#allocation15], 16
    $region85: #{tpu_custom_call.1} parent=1 // pred_fallthru
      _
    // Predicated region
    $region86: #{tpu_custom_call.1} parent=1 // pred_check
      _
    $region87: #{tpu_custom_call.1} parent=1 // pred_check_branch
      %199 = sbr.rel (0) target = $region89
    $region88: #{tpu_custom_call.1} parent=1 // pred_region
      %200 = dma.done [#allocation15], 2048
    $region89: #{tpu_custom_call.1} parent=1 // pred_fallthru
      _
    // Predicated region
    $region90: #{tpu_custom_call.1} parent=1 // pred_check
      _
    $region91: #{tpu_custom_call.1} parent=1 // pred_check_branch
      %202 = sbr.rel (0) target = $region93
    $region92: #{tpu_custom_call.1} parent=1 // pred_region
      %203 = dma.done [#allocation18], 2048
    $region93: #{tpu_custom_call.1} parent=1 // pred_fallthru
      _
    // Predicated region
    $region94: #{tpu_custom_call.1} parent=1 // pred_check
      _
    $region95: #{tpu_custom_call.1} parent=1 // pred_check_branch
      %205 = sbr.rel (0) target = $region97
    $region96: #{tpu_custom_call.1} parent=1 // pred_region
      %206 = dma.done [#allocation18], 2048
    $region97: #{tpu_custom_call.1} parent=1 // pred_fallthru
      _
    // Predicated region
    $region98: #{tpu_custom_call.1} parent=1 // pred_check
      _
    $region99: #{tpu_custom_call.1} parent=1 // pred_check_branch
      %208 = sbr.rel (0) target = $region101
    $region100: #{tpu_custom_call.1} parent=1 // pred_region
      %209 = dma.done [#allocation21], 16
    $region101: #{tpu_custom_call.1} parent=1 // pred_fallthru
      _
    // Predicated region
    $region102: #{tpu_custom_call.1} parent=1 // pred_check
      _
    $region103: #{tpu_custom_call.1} parent=1 // pred_check_branch
      %211 = sbr.rel (0) target = $region105
    $region104: #{tpu_custom_call.1} parent=1 // pred_region
      %212 = dma.done [#allocation21], 16
    $region105: #{tpu_custom_call.1} parent=1 // pred_fallthru
      _
    %v214 = vld [vmem:[#allocation2] sm:$0xff]
    %v215 = vld [vmem:[#allocation2 + $0x8] sm:$0xff]
    %v216 = vld [vmem:[#allocation2 + $0x10] sm:$0xff]
    %v217 = vld [vmem:[#allocation2 + $0x18] sm:$0xff]
    %v218 = vld [vmem:[#allocation10] sm:$0xf]
    %v219 = vld [vmem:[#allocation10 + $0x4] sm:$0xf]
    %v220 = vld [vmem:[#allocation10 + $0x8] sm:$0xf]
    %v221 = vld [vmem:[#allocation10 + $0xc] sm:$0xf]
    %v222 = vld [vmem:[#allocation10 + $0x10] sm:$0xf]
    %v223 = vld [vmem:[#allocation10 + $0x14] sm:$0xf]
    %v224 = vld [vmem:[#allocation10 + $0x18] sm:$0xf]
    %v225 = vld [vmem:[#allocation10 + $0x1c] sm:$0xf]
    %v226 = vld [vmem:[#allocation10 + $0x20] sm:$0xf]
    %v227 = vld [vmem:[#allocation10 + $0x24] sm:$0xf]
    %v228 = vld [vmem:[#allocation10 + $0x28] sm:$0xf]
    %v229 = vld [vmem:[#allocation10 + $0x2c] sm:$0xf]
    %v230 = vld [vmem:[#allocation10 + $0x30] sm:$0xf]
    %v231 = vld [vmem:[#allocation10 + $0x34] sm:$0xf]
    %v232 = vld [vmem:[#allocation10 + $0x38] sm:$0xf]
    %v233 = vld [vmem:[#allocation10 + $0x3c] sm:$0xf]
    %v234 = vld [vmem:[#allocation11] sm:$0xf]
    %v235 = vld [vmem:[#allocation11 + $0x4] sm:$0xf]
    %v236 = vld [vmem:[#allocation11 + $0x8] sm:$0xf]
    %v237 = vld [vmem:[#allocation11 + $0xc] sm:$0xf]
    %v238 = vld [vmem:[#allocation11 + $0x10] sm:$0xf]
    %v239 = vld [vmem:[#allocation11 + $0x14] sm:$0xf]
    %v240 = vld [vmem:[#allocation11 + $0x18] sm:$0xf]
    %v241 = vld [vmem:[#allocation11 + $0x1c] sm:$0xf]
    %v242 = vld [vmem:[#allocation11 + $0x20] sm:$0xf]
    %v243 = vld [vmem:[#allocation11 + $0x24] sm:$0xf]
    %v244 = vld [vmem:[#allocation11 + $0x28] sm:$0xf]
    %v245 = vld [vmem:[#allocation11 + $0x2c] sm:$0xf]
    %v246 = vld [vmem:[#allocation11 + $0x30] sm:$0xf]
    %v247 = vld [vmem:[#allocation11 + $0x34] sm:$0xf]
    %v248 = vld [vmem:[#allocation11 + $0x38] sm:$0xf]
    %v249 = vld [vmem:[#allocation11 + $0x3c] sm:$0xf]
    %v250 = vpack.c.bf16 %v215, %v214
    %v251 = vpack.c.bf16 %v217, %v216
    %v252 = vld [vmem:[#allocation5] sm:$0xf]
    %v253 = vld [vmem:[#allocation5 + $0x4] sm:$0xf]
    %v254 = vld [vmem:[#allocation5 + $0x8] sm:$0xf]
    %v255 = vld [vmem:[#allocation5 + $0xc] sm:$0xf]
    %v256 = vld [vmem:[#allocation5 + $0x10] sm:$0xf]
    %v257 = vld [vmem:[#allocation5 + $0x14] sm:$0xf]
    %v258 = vld [vmem:[#allocation5 + $0x18] sm:$0xf]
    %v259 = vld [vmem:[#allocation5 + $0x1c] sm:$0xf]
    %v260 = vld [vmem:[#allocation5 + $0x20] sm:$0xf]
    %v261 = vld [vmem:[#allocation5 + $0x24] sm:$0xf]
    %v262 = vld [vmem:[#allocation5 + $0x28] sm:$0xf]
    %v263 = vld [vmem:[#allocation5 + $0x2c] sm:$0xf]
    %v264 = vld [vmem:[#allocation5 + $0x30] sm:$0xf]
    %v265 = vld [vmem:[#allocation5 + $0x34] sm:$0xf]
    %v266 = vld [vmem:[#allocation5 + $0x38] sm:$0xf]
    %v267 = vld [vmem:[#allocation5 + $0x3c] sm:$0xf]
    %v284 = vunpack.c.l.b16 %v252
    %v285 = vunpack.c.l.b16 %v253
    %v286 = vunpack.c.l.b16 %v254
    %v287 = vunpack.c.l.b16 %v255
    %v288 = vunpack.c.l.b16 %v256
    %v289 = vunpack.c.l.b16 %v257
    %v290 = vunpack.c.l.b16 %v258
    %v291 = vunpack.c.l.b16 %v259
    %v292 = vunpack.c.l.b16 %v260
    %v293 = vunpack.c.l.b16 %v261
    %v294 = vunpack.c.l.b16 %v262
    %v295 = vunpack.c.l.b16 %v263
    %v296 = vunpack.c.l.b16 %v264
    %v297 = vunpack.c.l.b16 %v265
    %v298 = vunpack.c.l.b16 %v266
    %v299 = vunpack.c.l.b16 %v267
    %v300 = vpack.c.b16 %v285, %v284
    %v301 = vpack.c.b16 %v287, %v286
    %v302 = vpack.c.b16 %v289, %v288
    %v303 = vpack.c.b16 %v291, %v290
    %v304 = vpack.c.b16 %v293, %v292
    %v305 = vpack.c.b16 %v295, %v294
    %v306 = vpack.c.b16 %v297, %v296
    %v307 = vpack.c.b16 %v299, %v298
    %316 = vmatprep.subr.bf16.mxu0 0
    %317 = vmatpush1.bf16.msra.mxu0 %v300
    %318 = vmatprep.subr.bf16.mxu0 0
    %319 = vmatpush1.bf16.msra.mxu0 %v301
    %320 = vmatprep.subr.bf16.mxu0 0
    %321 = vmatpush1.bf16.msra.mxu0 %v302
    %322 = vmatprep.subr.bf16.mxu0 0
    %323 = vmatpush1.bf16.msra.mxu0 %v303
    %324 = vmatprep.subr.bf16.mxu0 0
    %325 = vmatpush1.bf16.msra.mxu0 %v304
    %326 = vmatprep.subr.bf16.mxu0 0
    %327 = vmatpush1.bf16.msra.mxu0 %v305
    %328 = vmatprep.subr.bf16.mxu0 0
    %329 = vmatpush1.bf16.msra.mxu0 %v306
    %330 = vmatprep.subr.bf16.mxu0 0
    %331 = vmatpush1.bf16.msra.mxu0 %v307
    %332 = vmatprep.subr.bf16.mxu0 0
    %333 = vmatpush1.bf16.msra.mxu0 0
    %334 = vmatprep.subr.bf16.mxu0 0
    %335 = vmatpush1.bf16.msra.mxu0 0
    %336 = vmatprep.subr.bf16.mxu0 0
    %337 = vmatpush1.bf16.msra.mxu0 0
    %338 = vmatprep.subr.bf16.mxu0 0
    %339 = vmatpush1.bf16.msra.mxu0 0
    %340 = vmatprep.subr.bf16.mxu0 0
    %341 = vmatpush1.bf16.msra.mxu0 0
    %342 = vmatprep.subr.bf16.mxu0 0
    %343 = vmatpush1.bf16.msra.mxu0 0
    %344 = vmatprep.subr.bf16.mxu0 0
    %345 = vmatpush1.bf16.msra.mxu0 0
    %346 = vmatprep.subr.bf16.mxu0 0
    %347 = vmatpush1.bf16.msra.mxu0 0
    %348 = vmatprep.mubr.bf16.mxu0 0
    %349 = vmatmul.mubr.bf16.gmra.mrb[0].mxu0 %v250
    %v350 = vpop.f32.mrb[0].mxu0
    %v351 = vadd.f32 0.0, %v350
    %v352 = vpop.f32.mrb[0].mxu0
    %v353 = vpop.f32.mrb[0].mxu0
    %v354 = vadd.f32 0.0, %v353
    %v355 = vpop.f32.mrb[0].mxu0
    %356 = vmatprep.mubr.bf16.mxu0 0
    %357 = vmatmul.mubr.bf16.gmra.mrb[0].mxu0 %v251
    %v358 = vpop.f32.mrb[0].mxu0
    %v359 = vadd.f32 0.0, %v358
    %v360 = vpop.f32.mrb[0].mxu0
    %v361 = vpop.f32.mrb[0].mxu0
    %v362 = vadd.f32 0.0, %v361
    %v363 = vpop.f32.mrb[0].mxu0
    %364 = vdwg.mxu0
    %v365 = vld [vmem:[#allocation7] sm:$0xff]
    %v366 = vld [vmem:[#allocation7 + $0x8] sm:$0xff]
    %v367 = vld [vmem:[#allocation7 + $0x10] sm:$0xff]
    %v368 = vld [vmem:[#allocation7 + $0x18] sm:$0xff]
    %v369 = vld [vmem:[#allocation7 + $0x20] sm:$0xff]
    %v370 = vld [vmem:[#allocation7 + $0x28] sm:$0xff]
    %v371 = vld [vmem:[#allocation7 + $0x30] sm:$0xff]
    %v372 = vld [vmem:[#allocation7 + $0x38] sm:$0xff]
    %v373 = vld [vmem:[#allocation7 + $0x40] sm:$0xff]
    %v374 = vld [vmem:[#allocation7 + $0x48] sm:$0xff]
    %v375 = vld [vmem:[#allocation7 + $0x50] sm:$0xff]
    %v376 = vld [vmem:[#allocation7 + $0x58] sm:$0xff]
    %v377 = vld [vmem:[#allocation7 + $0x60] sm:$0xff]
    %v378 = vld [vmem:[#allocation7 + $0x68] sm:$0xff]
    %v379 = vld [vmem:[#allocation7 + $0x70] sm:$0xff]
    %v380 = vld [vmem:[#allocation7 + $0x78] sm:$0xff]
    %v397 = vunpack.c.l.b16 %v365
    %v398 = vunpack.c.h.b16 %v365
    %v399 = vunpack.c.l.b16 %v366
    %v400 = vunpack.c.h.b16 %v366
    %v401 = vunpack.c.l.b16 %v367
    %v402 = vunpack.c.h.b16 %v367
    %v403 = vunpack.c.l.b16 %v368
    %v404 = vunpack.c.h.b16 %v368
    %v405 = vunpack.c.l.b16 %v369
    %v406 = vunpack.c.h.b16 %v369
    %v407 = vunpack.c.l.b16 %v370
    %v408 = vunpack.c.h.b16 %v370
    %v409 = vunpack.c.l.b16 %v371
    %v410 = vunpack.c.h.b16 %v371
    %v411 = vunpack.c.l.b16 %v372
    %v412 = vunpack.c.h.b16 %v372
    %v413 = vunpack.c.l.b16 %v373
    %v414 = vunpack.c.h.b16 %v373
    %v415 = vunpack.c.l.b16 %v374
    %v416 = vunpack.c.h.b16 %v374
    %v417 = vunpack.c.l.b16 %v375
    %v418 = vunpack.c.h.b16 %v375
    %v419 = vunpack.c.l.b16 %v376
    %v420 = vunpack.c.h.b16 %v376
    %v421 = vunpack.c.l.b16 %v377
    %v422 = vunpack.c.h.b16 %v377
    %v423 = vunpack.c.l.b16 %v378
    %v424 = vunpack.c.h.b16 %v378
    %v425 = vunpack.c.l.b16 %v379
    %v426 = vunpack.c.h.b16 %v379
    %v427 = vunpack.c.l.b16 %v380
    %v428 = vunpack.c.h.b16 %v380
    %v429 = vpack.c.b16 %v399, %v397
    %v430 = vpack.c.b16 %v400, %v398
    %v431 = vpack.c.b16 %v403, %v401
    %v432 = vpack.c.b16 %v404, %v402
    %v433 = vpack.c.b16 %v407, %v405
    %v434 = vpack.c.b16 %v408, %v406
    %v435 = vpack.c.b16 %v411, %v409
    %v436 = vpack.c.b16 %v412, %v410
    %v437 = vpack.c.b16 %v415, %v413
    %v438 = vpack.c.b16 %v416, %v414
    %v439 = vpack.c.b16 %v419, %v417
    %v440 = vpack.c.b16 %v420, %v418
    %v441 = vpack.c.b16 %v423, %v421
    %v442 = vpack.c.b16 %v424, %v422
    %v443 = vpack.c.b16 %v427, %v425
    %v444 = vpack.c.b16 %v428, %v426
    %461 = vmatprep.subr.bf16.mxu0 %v430
    %462 = vmatpush1.bf16.msra.mxu0 %v429
    %463 = vmatprep.subr.bf16.mxu0 %v432
    %464 = vmatpush1.bf16.msra.mxu0 %v431
    %465 = vmatprep.subr.bf16.mxu0 %v434
    %466 = vmatpush1.bf16.msra.mxu0 %v433
    %467 = vmatprep.subr.bf16.mxu0 %v436
    %468 = vmatpush1.bf16.msra.mxu0 %v435
    %469 = vmatprep.subr.bf16.mxu0 %v438
    %470 = vmatpush1.bf16.msra.mxu0 %v437
    %471 = vmatprep.subr.bf16.mxu0 %v440
    %472 = vmatpush1.bf16.msra.mxu0 %v439
    %473 = vmatprep.subr.bf16.mxu0 %v442
    %474 = vmatpush1.bf16.msra.mxu0 %v441
    %475 = vmatprep.subr.bf16.mxu0 %v444
    %476 = vmatpush1.bf16.msra.mxu0 %v443
    %477 = vmatprep.subr.bf16.mxu0 0
    %478 = vmatpush1.bf16.msra.mxu0 0
    %479 = vmatprep.subr.bf16.mxu0 0
    %480 = vmatpush1.bf16.msra.mxu0 0
    %481 = vmatprep.subr.bf16.mxu0 0
    %482 = vmatpush1.bf16.msra.mxu0 0
    %483 = vmatprep.subr.bf16.mxu0 0
    %484 = vmatpush1.bf16.msra.mxu0 0
    %485 = vmatprep.subr.bf16.mxu0 0
    %486 = vmatpush1.bf16.msra.mxu0 0
    %487 = vmatprep.subr.bf16.mxu0 0
    %488 = vmatpush1.bf16.msra.mxu0 0
    %489 = vmatprep.subr.bf16.mxu0 0
    %490 = vmatpush1.bf16.msra.mxu0 0
    %491 = vmatprep.subr.bf16.mxu0 0
    %492 = vmatpush1.bf16.msra.mxu0 0
    %493 = vmatprep.mubr.bf16.mxu0 0
    %494 = vmatmul.mubr.bf16.gmra.mrb[0].mxu0 %v250
    %v495 = vpop.f32.mrb[0].mxu0
    %v496 = vadd.f32 0.0, %v495
    %v497 = vpop.f32.mrb[0].mxu0
    %v498 = vadd.f32 0.0, %v497
    %v499 = vpop.f32.mrb[0].mxu0
    %v500 = vadd.f32 0.0, %v499
    %v501 = vpop.f32.mrb[0].mxu0
    %v502 = vadd.f32 0.0, %v501
    %503 = vmatprep.mubr.bf16.mxu0 0
    %504 = vmatmul.mubr.bf16.gmra.mrb[0].mxu0 %v251
    %v505 = vpop.f32.mrb[0].mxu0
    %v506 = vadd.f32 0.0, %v505
    %v507 = vpop.f32.mrb[0].mxu0
    %v508 = vadd.f32 0.0, %v507
    %v509 = vpop.f32.mrb[0].mxu0
    %v510 = vadd.f32 0.0, %v509
    %v511 = vpop.f32.mrb[0].mxu0
    %v512 = vadd.f32 0.0, %v511
    %513 = vdwg.mxu0
    %vm514 = vcmp.gt.f32.partialorder %v351, 0.0
    %vm515 = vcmp.gt.f32.partialorder %v354, 0.0
    %vm516 = vcmp.gt.f32.partialorder %v359, 0.0
    %vm517 = vcmp.gt.f32.partialorder %v362, 0.0
    %v518 = vadd.f32 %v351, 1.0
    %v519 = vadd.f32 %v354, 1.0
    %v520 = vadd.f32 %v359, 1.0
    %v521 = vadd.f32 %v362, 1.0
    %v522 = vmin.f32 %v351, 0.0
    %v523 = vmin.f32 %v354, 0.0
    %v524 = vmin.f32 %v359, 0.0
    %v525 = vmin.f32 %v362, 0.0
    %v526 = vmul.f32 %v522, 1.442695
    %v527 = vpow.pop %v526
    %v528 = vmul.f32 %v523, 1.442695
    %v529 = vpow.pop %v528
    %v530 = vmul.f32 %v524, 1.442695
    %v531 = vpow.pop %v530
    %v532 = vmul.f32 %v525, 1.442695
    %v533 = vpow.pop %v532
    %v534 = vsel %vm514, %v518, %v527
    %v535 = vsel %vm515, %v519, %v529
    %v536 = vsel %vm516, %v520, %v531
    %v537 = vsel %vm517, %v521, %v533
    %vm538 = vcmp.gt.f32.partialorder %v496, 0.0
    %vm539 = vcmp.gt.f32.partialorder %v500, 0.0
    %vm540 = vcmp.gt.f32.partialorder %v506, 0.0
    %vm541 = vcmp.gt.f32.partialorder %v510, 0.0
    %v542 = vadd.f32 %v496, 1.0
    %v543 = vadd.f32 %v500, 1.0
    %v544 = vadd.f32 %v506, 1.0
    %v545 = vadd.f32 %v510, 1.0
    %v546 = vmin.f32 %v496, 0.0
    %v547 = vmin.f32 %v500, 0.0
    %v548 = vmin.f32 %v506, 0.0
    %v549 = vmin.f32 %v510, 0.0
    %v550 = vmul.f32 %v546, 1.442695
    %v551 = vpow.pop %v550
    %v552 = vmul.f32 %v547, 1.442695
    %v553 = vpow.pop %v552
    %v554 = vmul.f32 %v548, 1.442695
    %v555 = vpow.pop %v554
    %v556 = vmul.f32 %v549, 1.442695
    %v557 = vpow.pop %v556
    %v558 = vsel %vm538, %v542, %v551
    %v559 = vsel %vm539, %v543, %v553
    %v560 = vsel %vm540, %v544, %v555
    %v561 = vsel %vm541, %v545, %v557
    %v562 = vpack.c.bf16 %v558, %v558
    %v563 = vpack.c.bf16 %v559, %v559
    %v564 = vpack.c.bf16 %v560, %v560
    %v565 = vpack.c.bf16 %v561, %v561
    %v566 = vpack.c.bf16 %v498, %v498
    %v567 = vpack.c.bf16 %v502, %v502
    %v568 = vpack.c.bf16 %v508, %v508
    %v569 = vpack.c.bf16 %v512, %v512
    %570 = vxpose.xlu0.c.b16.start [1/8] %v562, 128
    %571 = vxpose.xlu0.c.b16.cont [2/8] 0, 128
    %572 = vxpose.xlu0.c.b16.cont [3/8] 0, 128
    %573 = vxpose.xlu0.c.b16.cont [4/8] 0, 128
    %574 = vxpose.xlu0.c.b16.cont [5/8] 0, 128
    %575 = vxpose.xlu0.c.b16.cont [6/8] 0, 128
    %576 = vxpose.xlu0.c.b16.cont [7/8] 0, 128
    %577 = vxpose.xlu0.c.b16.end [8/8] 0, 128
    %v578 = vpop.trf.xlu0
    %v579 = vpop.trf.xlu0
    %v580 = vpop.trf.xlu0
    %v581 = vpop.trf.xlu0
    %v582 = vpop.trf.xlu0
    %v583 = vpop.trf.xlu0
    %v584 = vpop.trf.xlu0
    %v585 = vpop.trf.xlu0
    %vm586 = vcmask 64512
    %v588 = vsel %vm586, %v578, 0
    %v591 = vsel %vm586, %v579, 0
    %v594 = vsel %vm586, %v580, 0
    %v597 = vsel %vm586, %v581, 0
    %v600 = vsel %vm586, %v582, 0
    %v603 = vsel %vm586, %v583, 0
    %v606 = vsel %vm586, %v584, 0
    %v609 = vsel %vm586, %v585, 0
    %vm611 = vcmask 1043456
    %v613 = vsel %vm611, %v566, 0
    %615 = vmatprep.subr.bf16.mxu0 0
    %616 = vmatpush1.bf16.msra.mxu0 %v613
    %617 = vmatprep.subr.bf16.mxu0 0
    %618 = vmatpush1.bf16.msra.mxu0 0
    %619 = vmatprep.subr.bf16.mxu0 0
    %620 = vmatpush1.bf16.msra.mxu0 0
    %621 = vmatprep.subr.bf16.mxu0 0
    %622 = vmatpush1.bf16.msra.mxu0 0
    %623 = vmatprep.subr.bf16.mxu0 0
    %624 = vmatpush1.bf16.msra.mxu0 0
    %625 = vmatprep.subr.bf16.mxu0 0
    %626 = vmatpush1.bf16.msra.mxu0 0
    %627 = vmatprep.subr.bf16.mxu0 0
    %628 = vmatpush1.bf16.msra.mxu0 0
    %629 = vmatprep.subr.bf16.mxu0 0
    %630 = vmatpush1.bf16.msra.mxu0 0
    %631 = vmatprep.subr.bf16.mxu0 0
    %632 = vmatpush1.bf16.msra.mxu0 0
    %633 = vmatprep.subr.bf16.mxu0 0
    %634 = vmatpush1.bf16.msra.mxu0 0
    %635 = vmatprep.subr.bf16.mxu0 0
    %636 = vmatpush1.bf16.msra.mxu0 0
    %637 = vmatprep.subr.bf16.mxu0 0
    %638 = vmatpush1.bf16.msra.mxu0 0
    %639 = vmatprep.subr.bf16.mxu0 0
    %640 = vmatpush1.bf16.msra.mxu0 0
    %641 = vmatprep.subr.bf16.mxu0 0
    %642 = vmatpush1.bf16.msra.mxu0 0
    %643 = vmatprep.subr.bf16.mxu0 0
    %644 = vmatpush1.bf16.msra.mxu0 0
    %645 = vmatprep.subr.bf16.mxu0 0
    %646 = vmatpush1.bf16.msra.mxu0 0
    %647 = vmatprep.mubr.bf16.mxu0 0
    %648 = vmatmul.mubr.bf16.gmra.mrb[0].mxu0 %v588
    %v649 = vpop.f32.mrb[0].mxu0
    %v650 = vadd.f32 0.0, %v649
    %v651 = vpop.f32.mrb[0].mxu0
    %v652 = vpop.f32.mrb[0].mxu0
    %v653 = vadd.f32 0.0, %v652
    %v654 = vpop.f32.mrb[0].mxu0
    %655 = vmatprep.mubr.bf16.mxu0 0
    %656 = vmatmul.mubr.bf16.gmra.mrb[0].mxu0 %v591
    %v657 = vpop.f32.mrb[0].mxu0
    %v658 = vadd.f32 0.0, %v657
    %v659 = vpop.f32.mrb[0].mxu0
    %v660 = vpop.f32.mrb[0].mxu0
    %v661 = vadd.f32 0.0, %v660
    %v662 = vpop.f32.mrb[0].mxu0
    %663 = vmatprep.mubr.bf16.mxu0 0
    %664 = vmatmul.mubr.bf16.gmra.mrb[0].mxu0 %v594
    %v665 = vpop.f32.mrb[0].mxu0
    %v666 = vadd.f32 0.0, %v665
    %v667 = vpop.f32.mrb[0].mxu0
    %v668 = vpop.f32.mrb[0].mxu0
    %v669 = vadd.f32 0.0, %v668
    %v670 = vpop.f32.mrb[0].mxu0
    %671 = vmatprep.mubr.bf16.mxu0 0
    %672 = vmatmul.mubr.bf16.gmra.mrb[0].mxu0 %v597
    %v673 = vpop.f32.mrb[0].mxu0
    %v674 = vadd.f32 0.0, %v673
    %v675 = vpop.f32.mrb[0].mxu0
    %v676 = vpop.f32.mrb[0].mxu0
    %v677 = vadd.f32 0.0, %v676
    %v678 = vpop.f32.mrb[0].mxu0
    %679 = vmatprep.mubr.bf16.mxu0 0
    %680 = vmatmul.mubr.bf16.gmra.mrb[0].mxu0 %v600
    %v681 = vpop.f32.mrb[0].mxu0
    %v682 = vadd.f32 0.0, %v681
    %v683 = vpop.f32.mrb[0].mxu0
    %v684 = vpop.f32.mrb[0].mxu0
    %v685 = vadd.f32 0.0, %v684
    %v686 = vpop.f32.mrb[0].mxu0
    %687 = vmatprep.mubr.bf16.mxu0 0
    %688 = vmatmul.mubr.bf16.gmra.mrb[0].mxu0 %v603
    %v689 = vpop.f32.mrb[0].mxu0
    %v690 = vadd.f32 0.0, %v689
    %v691 = vpop.f32.mrb[0].mxu0
    %v692 = vpop.f32.mrb[0].mxu0
    %v693 = vadd.f32 0.0, %v692
    %v694 = vpop.f32.mrb[0].mxu0
    %695 = vmatprep.mubr.bf16.mxu0 0
    %696 = vmatmul.mubr.bf16.gmra.mrb[0].mxu0 %v606
    %v697 = vpop.f32.mrb[0].mxu0
    %v698 = vadd.f32 0.0, %v697
    %v699 = vpop.f32.mrb[0].mxu0
    %v700 = vpop.f32.mrb[0].mxu0
    %v701 = vadd.f32 0.0, %v700
    %v702 = vpop.f32.mrb[0].mxu0
    %703 = vmatprep.mubr.bf16.mxu0 0
    %704 = vmatmul.mubr.bf16.gmra.mrb[0].mxu0 %v609
    %v705 = vpop.f32.mrb[0].mxu0
    %v706 = vadd.f32 0.0, %v705
    %v707 = vpop.f32.mrb[0].mxu0
    %v708 = vpop.f32.mrb[0].mxu0
    %v709 = vadd.f32 0.0, %v708
    %v710 = vpop.f32.mrb[0].mxu0
    %711 = vdwg.mxu0
    %712 = vxpose.xlu0.c.b16.start [1/8] %v563, 128
    %713 = vxpose.xlu0.c.b16.cont [2/8] 0, 128
    %714 = vxpose.xlu0.c.b16.cont [3/8] 0, 128
    %715 = vxpose.xlu0.c.b16.cont [4/8] 0, 128
    %716 = vxpose.xlu0.c.b16.cont [5/8] 0, 128
    %717 = vxpose.xlu0.c.b16.cont [6/8] 0, 128
    %718 = vxpose.xlu0.c.b16.cont [7/8] 0, 128
    %719 = vxpose.xlu0.c.b16.end [8/8] 0, 128
    %v720 = vpop.trf.xlu0
    %v721 = vpop.trf.xlu0
    %v722 = vpop.trf.xlu0
    %v723 = vpop.trf.xlu0
    %v724 = vpop.trf.xlu0
    %v725 = vpop.trf.xlu0
    %v726 = vpop.trf.xlu0
    %v727 = vpop.trf.xlu0
    %v729 = vsel %vm586, %v720, 0
    %v732 = vsel %vm586, %v721, 0
    %v735 = vsel %vm586, %v722, 0
    %v738 = vsel %vm586, %v723, 0
    %v741 = vsel %vm586, %v724, 0
    %v744 = vsel %vm586, %v725, 0
    %v747 = vsel %vm586, %v726, 0
    %v750 = vsel %vm586, %v727, 0
    %v753 = vsel %vm611, %v567, 0
    %755 = vmatprep.subr.bf16.mxu0 0
    %756 = vmatpush1.bf16.msra.mxu0 %v753
    %757 = vmatprep.subr.bf16.mxu0 0
    %758 = vmatpush1.bf16.msra.mxu0 0
    %759 = vmatprep.subr.bf16.mxu0 0
    %760 = vmatpush1.bf16.msra.mxu0 0
    %761 = vmatprep.subr.bf16.mxu0 0
    %762 = vmatpush1.bf16.msra.mxu0 0
    %763 = vmatprep.subr.bf16.mxu0 0
    %764 = vmatpush1.bf16.msra.mxu0 0
    %765 = vmatprep.subr.bf16.mxu0 0
    %766 = vmatpush1.bf16.msra.mxu0 0
    %767 = vmatprep.subr.bf16.mxu0 0
    %768 = vmatpush1.bf16.msra.mxu0 0
    %769 = vmatprep.subr.bf16.mxu0 0
    %770 = vmatpush1.bf16.msra.mxu0 0
    %771 = vmatprep.subr.bf16.mxu0 0
    %772 = vmatpush1.bf16.msra.mxu0 0
    %773 = vmatprep.subr.bf16.mxu0 0
    %774 = vmatpush1.bf16.msra.mxu0 0
    %775 = vmatprep.subr.bf16.mxu0 0
    %776 = vmatpush1.bf16.msra.mxu0 0
    %777 = vmatprep.subr.bf16.mxu0 0
    %778 = vmatpush1.bf16.msra.mxu0 0
    %779 = vmatprep.subr.bf16.mxu0 0
    %780 = vmatpush1.bf16.msra.mxu0 0
    %781 = vmatprep.subr.bf16.mxu0 0
    %782 = vmatpush1.bf16.msra.mxu0 0
    %783 = vmatprep.subr.bf16.mxu0 0
    %784 = vmatpush1.bf16.msra.mxu0 0
    %785 = vmatprep.subr.bf16.mxu0 0
    %786 = vmatpush1.bf16.msra.mxu0 0
    %787 = vmatprep.mubr.bf16.mxu0 0
    %788 = vmatmul.mubr.bf16.gmra.mrb[0].mxu0 %v729
    %v789 = vpop.f32.mrb[0].mxu0
    %v790 = vadd.f32 0.0, %v789
    %v791 = vpop.f32.mrb[0].mxu0
    %v792 = vpop.f32.mrb[0].mxu0
    %v793 = vadd.f32 0.0, %v792
    %v794 = vpop.f32.mrb[0].mxu0
    %795 = vmatprep.mubr.bf16.mxu0 0
    %796 = vmatmul.mubr.bf16.gmra.mrb[0].mxu0 %v732
    %v797 = vpop.f32.mrb[0].mxu0
    %v798 = vadd.f32 0.0, %v797
    %v799 = vpop.f32.mrb[0].mxu0
    %v800 = vpop.f32.mrb[0].mxu0
    %v801 = vadd.f32 0.0, %v800
    %v802 = vpop.f32.mrb[0].mxu0
    %803 = vmatprep.mubr.bf16.mxu0 0
    %804 = vmatmul.mubr.bf16.gmra.mrb[0].mxu0 %v735
    %v805 = vpop.f32.mrb[0].mxu0
    %v806 = vadd.f32 0.0, %v805
    %v807 = vpop.f32.mrb[0].mxu0
    %v808 = vpop.f32.mrb[0].mxu0
    %v809 = vadd.f32 0.0, %v808
    %v810 = vpop.f32.mrb[0].mxu0
    %811 = vmatprep.mubr.bf16.mxu0 0
    %812 = vmatmul.mubr.bf16.gmra.mrb[0].mxu0 %v738
    %v813 = vpop.f32.mrb[0].mxu0
    %v814 = vadd.f32 0.0, %v813
    %v815 = vpop.f32.mrb[0].mxu0
    %v816 = vpop.f32.mrb[0].mxu0
    %v817 = vadd.f32 0.0, %v816
    %v818 = vpop.f32.mrb[0].mxu0
    %819 = vmatprep.mubr.bf16.mxu0 0
    %820 = vmatmul.mubr.bf16.gmra.mrb[0].mxu0 %v741
    %v821 = vpop.f32.mrb[0].mxu0
    %v822 = vadd.f32 0.0, %v821
    %v823 = vpop.f32.mrb[0].mxu0
    %v824 = vpop.f32.mrb[0].mxu0
    %v825 = vadd.f32 0.0, %v824
    %v826 = vpop.f32.mrb[0].mxu0
    %827 = vmatprep.mubr.bf16.mxu0 0
    %828 = vmatmul.mubr.bf16.gmra.mrb[0].mxu0 %v744
    %v829 = vpop.f32.mrb[0].mxu0
    %v830 = vadd.f32 0.0, %v829
    %v831 = vpop.f32.mrb[0].mxu0
    %v832 = vpop.f32.mrb[0].mxu0
    %v833 = vadd.f32 0.0, %v832
    %v834 = vpop.f32.mrb[0].mxu0
    %835 = vmatprep.mubr.bf16.mxu0 0
    %836 = vmatmul.mubr.bf16.gmra.mrb[0].mxu0 %v747
    %v837 = vpop.f32.mrb[0].mxu0
    %v838 = vadd.f32 0.0, %v837
    %v839 = vpop.f32.mrb[0].mxu0
    %v840 = vpop.f32.mrb[0].mxu0
    %v841 = vadd.f32 0.0, %v840
    %v842 = vpop.f32.mrb[0].mxu0
    %843 = vmatprep.mubr.bf16.mxu0 0
    %844 = vmatmul.mubr.bf16.gmra.mrb[0].mxu0 %v750
    %v845 = vpop.f32.mrb[0].mxu0
    %v846 = vadd.f32 0.0, %v845
    %v847 = vpop.f32.mrb[0].mxu0
    %v848 = vpop.f32.mrb[0].mxu0
    %v849 = vadd.f32 0.0, %v848
    %v850 = vpop.f32.mrb[0].mxu0
    %851 = vdwg.mxu0
    %852 = vxpose.xlu0.c.b16.start [1/8] %v564, 128
    %853 = vxpose.xlu0.c.b16.cont [2/8] 0, 128
    %854 = vxpose.xlu0.c.b16.cont [3/8] 0, 128
    %855 = vxpose.xlu0.c.b16.cont [4/8] 0, 128
    %856 = vxpose.xlu0.c.b16.cont [5/8] 0, 128
    %857 = vxpose.xlu0.c.b16.cont [6/8] 0, 128
    %858 = vxpose.xlu0.c.b16.cont [7/8] 0, 128
    %859 = vxpose.xlu0.c.b16.end [8/8] 0, 128
    %v860 = vpop.trf.xlu0
    %v861 = vpop.trf.xlu0
    %v862 = vpop.trf.xlu0
    %v863 = vpop.trf.xlu0
    %v864 = vpop.trf.xlu0
    %v865 = vpop.trf.xlu0
    %v866 = vpop.trf.xlu0
    %v867 = vpop.trf.xlu0
    %v869 = vsel %vm586, %v860, 0
    %v872 = vsel %vm586, %v861, 0
    %v875 = vsel %vm586, %v862, 0
    %v878 = vsel %vm586, %v863, 0
    %v881 = vsel %vm586, %v864, 0
    %v884 = vsel %vm586, %v865, 0
    %v887 = vsel %vm586, %v866, 0
    %v890 = vsel %vm586, %v867, 0
    %v893 = vsel %vm611, %v568, 0
    %895 = vmatprep.subr.bf16.mxu0 0
    %896 = vmatpush1.bf16.msra.mxu0 %v893
    %897 = vmatprep.subr.bf16.mxu0 0
    %898 = vmatpush1.bf16.msra.mxu0 0
    %899 = vmatprep.subr.bf16.mxu0 0
    %900 = vmatpush1.bf16.msra.mxu0 0
    %901 = vmatprep.subr.bf16.mxu0 0
    %902 = vmatpush1.bf16.msra.mxu0 0
    %903 = vmatprep.subr.bf16.mxu0 0
    %904 = vmatpush1.bf16.msra.mxu0 0
    %905 = vmatprep.subr.bf16.mxu0 0
    %906 = vmatpush1.bf16.msra.mxu0 0
    %907 = vmatprep.subr.bf16.mxu0 0
    %908 = vmatpush1.bf16.msra.mxu0 0
    %909 = vmatprep.subr.bf16.mxu0 0
    %910 = vmatpush1.bf16.msra.mxu0 0
    %911 = vmatprep.subr.bf16.mxu0 0
    %912 = vmatpush1.bf16.msra.mxu0 0
    %913 = vmatprep.subr.bf16.mxu0 0
    %914 = vmatpush1.bf16.msra.mxu0 0
    %915 = vmatprep.subr.bf16.mxu0 0
    %916 = vmatpush1.bf16.msra.mxu0 0
    %917 = vmatprep.subr.bf16.mxu0 0
    %918 = vmatpush1.bf16.msra.mxu0 0
    %919 = vmatprep.subr.bf16.mxu0 0
    %920 = vmatpush1.bf16.msra.mxu0 0
    %921 = vmatprep.subr.bf16.mxu0 0
    %922 = vmatpush1.bf16.msra.mxu0 0
    %923 = vmatprep.subr.bf16.mxu0 0
    %924 = vmatpush1.bf16.msra.mxu0 0
    %925 = vmatprep.subr.bf16.mxu0 0
    %926 = vmatpush1.bf16.msra.mxu0 0
    %927 = vmatprep.mubr.bf16.mxu0 0
    %928 = vmatmul.mubr.bf16.gmra.mrb[0].mxu0 %v869
    %v929 = vpop.f32.mrb[0].mxu0
    %v930 = vadd.f32 0.0, %v929
    %v931 = vpop.f32.mrb[0].mxu0
    %v932 = vpop.f32.mrb[0].mxu0
    %v933 = vadd.f32 0.0, %v932
    %v934 = vpop.f32.mrb[0].mxu0
    %935 = vmatprep.mubr.bf16.mxu0 0
    %936 = vmatmul.mubr.bf16.gmra.mrb[0].mxu0 %v872
    %v937 = vpop.f32.mrb[0].mxu0
    %v938 = vadd.f32 0.0, %v937
    %v939 = vpop.f32.mrb[0].mxu0
    %v940 = vpop.f32.mrb[0].mxu0
    %v941 = vadd.f32 0.0, %v940
    %v942 = vpop.f32.mrb[0].mxu0
    %943 = vmatprep.mubr.bf16.mxu0 0
    %944 = vmatmul.mubr.bf16.gmra.mrb[0].mxu0 %v875
    %v945 = vpop.f32.mrb[0].mxu0
    %v946 = vadd.f32 0.0, %v945
    %v947 = vpop.f32.mrb[0].mxu0
    %v948 = vpop.f32.mrb[0].mxu0
    %v949 = vadd.f32 0.0, %v948
    %v950 = vpop.f32.mrb[0].mxu0
    %951 = vmatprep.mubr.bf16.mxu0 0
    %952 = vmatmul.mubr.bf16.gmra.mrb[0].mxu0 %v878
    %v953 = vpop.f32.mrb[0].mxu0
    %v954 = vadd.f32 0.0, %v953
    %v955 = vpop.f32.mrb[0].mxu0
    %v956 = vpop.f32.mrb[0].mxu0
    %v957 = vadd.f32 0.0, %v956
    %v958 = vpop.f32.mrb[0].mxu0
    %959 = vmatprep.mubr.bf16.mxu0 0
    %960 = vmatmul.mubr.bf16.gmra.mrb[0].mxu0 %v881
    %v961 = vpop.f32.mrb[0].mxu0
    %v962 = vadd.f32 0.0, %v961
    %v963 = vpop.f32.mrb[0].mxu0
    %v964 = vpop.f32.mrb[0].mxu0
    %v965 = vadd.f32 0.0, %v964
    %v966 = vpop.f32.mrb[0].mxu0
    %967 = vmatprep.mubr.bf16.mxu0 0
    %968 = vmatmul.mubr.bf16.gmra.mrb[0].mxu0 %v884
    %v969 = vpop.f32.mrb[0].mxu0
    %v970 = vadd.f32 0.0, %v969
    %v971 = vpop.f32.mrb[0].mxu0
    %v972 = vpop.f32.mrb[0].mxu0
    %v973 = vadd.f32 0.0, %v972
    %v974 = vpop.f32.mrb[0].mxu0
    %975 = vmatprep.mubr.bf16.mxu0 0
    %976 = vmatmul.mubr.bf16.gmra.mrb[0].mxu0 %v887
    %v977 = vpop.f32.mrb[0].mxu0
    %v978 = vadd.f32 0.0, %v977
    %v979 = vpop.f32.mrb[0].mxu0
    %v980 = vpop.f32.mrb[0].mxu0
    %v981 = vadd.f32 0.0, %v980
    %v982 = vpop.f32.mrb[0].mxu0
    %983 = vmatprep.mubr.bf16.mxu0 0
    %984 = vmatmul.mubr.bf16.gmra.mrb[0].mxu0 %v890
    %v985 = vpop.f32.mrb[0].mxu0
    %v986 = vadd.f32 0.0, %v985
    %v987 = vpop.f32.mrb[0].mxu0
    %v988 = vpop.f32.mrb[0].mxu0
    %v989 = vadd.f32 0.0, %v988
    %v990 = vpop.f32.mrb[0].mxu0
    %991 = vdwg.mxu0
    %992 = vxpose.xlu0.c.b16.start [1/8] %v565, 128
    %993 = vxpose.xlu0.c.b16.cont [2/8] 0, 128
    %994 = vxpose.xlu0.c.b16.cont [3/8] 0, 128
    %995 = vxpose.xlu0.c.b16.cont [4/8] 0, 128
    %996 = vxpose.xlu0.c.b16.cont [5/8] 0, 128
    %997 = vxpose.xlu0.c.b16.cont [6/8] 0, 128
    %998 = vxpose.xlu0.c.b16.cont [7/8] 0, 128
    %999 = vxpose.xlu0.c.b16.end [8/8] 0, 128
    %v1000 = vpop.trf.xlu0
    %v1001 = vpop.trf.xlu0
    %v1002 = vpop.trf.xlu0
    %v1003 = vpop.trf.xlu0
    %v1004 = vpop.trf.xlu0
    %v1005 = vpop.trf.xlu0
    %v1006 = vpop.trf.xlu0
    %v1007 = vpop.trf.xlu0
    %v1009 = vsel %vm586, %v1000, 0
    %v1012 = vsel %vm586, %v1001, 0
    %v1015 = vsel %vm586, %v1002, 0
    %v1018 = vsel %vm586, %v1003, 0
    %v1021 = vsel %vm586, %v1004, 0
    %v1024 = vsel %vm586, %v1005, 0
    %v1027 = vsel %vm586, %v1006, 0
    %v1030 = vsel %vm586, %v1007, 0
    %v1033 = vsel %vm611, %v569, 0
    %1035 = vmatprep.subr.bf16.mxu0 0
    %1036 = vmatpush1.bf16.msra.mxu0 %v1033
    %1037 = vmatprep.subr.bf16.mxu0 0
    %1038 = vmatpush1.bf16.msra.mxu0 0
    %1039 = vmatprep.subr.bf16.mxu0 0
    %1040 = vmatpush1.bf16.msra.mxu0 0
    %1041 = vmatprep.subr.bf16.mxu0 0
    %1042 = vmatpush1.bf16.msra.mxu0 0
    %1043 = vmatprep.subr.bf16.mxu0 0
    %1044 = vmatpush1.bf16.msra.mxu0 0
    %1045 = vmatprep.subr.bf16.mxu0 0
    %1046 = vmatpush1.bf16.msra.mxu0 0
    %1047 = vmatprep.subr.bf16.mxu0 0
    %1048 = vmatpush1.bf16.msra.mxu0 0
    %1049 = vmatprep.subr.bf16.mxu0 0
    %1050 = vmatpush1.bf16.msra.mxu0 0
    %1051 = vmatprep.subr.bf16.mxu0 0
    %1052 = vmatpush1.bf16.msra.mxu0 0
    %1053 = vmatprep.subr.bf16.mxu0 0
    %1054 = vmatpush1.bf16.msra.mxu0 0
    %1055 = vmatprep.subr.bf16.mxu0 0
    %1056 = vmatpush1.bf16.msra.mxu0 0
    %1057 = vmatprep.subr.bf16.mxu0 0
    %1058 = vmatpush1.bf16.msra.mxu0 0
    %1059 = vmatprep.subr.bf16.mxu0 0
    %1060 = vmatpush1.bf16.msra.mxu0 0
    %1061 = vmatprep.subr.bf16.mxu0 0
    %1062 = vmatpush1.bf16.msra.mxu0 0
    %1063 = vmatprep.subr.bf16.mxu0 0
    %1064 = vmatpush1.bf16.msra.mxu0 0
    %1065 = vmatprep.subr.bf16.mxu0 0
    %1066 = vmatpush1.bf16.msra.mxu0 0
    %1067 = vmatprep.mubr.bf16.mxu0 0
    %1068 = vmatmul.mubr.bf16.gmra.mrb[0].mxu0 %v1009
    %v1069 = vpop.f32.mrb[0].mxu0
    %v1070 = vadd.f32 0.0, %v1069
    %v1071 = vpop.f32.mrb[0].mxu0
    %v1072 = vpop.f32.mrb[0].mxu0
    %v1073 = vadd.f32 0.0, %v1072
    %v1074 = vpop.f32.mrb[0].mxu0
    %1075 = vmatprep.mubr.bf16.mxu0 0
    %1076 = vmatmul.mubr.bf16.gmra.mrb[0].mxu0 %v1012
    %v1077 = vpop.f32.mrb[0].mxu0
    %v1078 = vadd.f32 0.0, %v1077
    %v1079 = vpop.f32.mrb[0].mxu0
    %v1080 = vpop.f32.mrb[0].mxu0
    %v1081 = vadd.f32 0.0, %v1080
    %v1082 = vpop.f32.mrb[0].mxu0
    %1083 = vmatprep.mubr.bf16.mxu0 0
    %1084 = vmatmul.mubr.bf16.gmra.mrb[0].mxu0 %v1015
    %v1085 = vpop.f32.mrb[0].mxu0
    %v1086 = vadd.f32 0.0, %v1085
    %v1087 = vpop.f32.mrb[0].mxu0
    %v1088 = vpop.f32.mrb[0].mxu0
    %v1089 = vadd.f32 0.0, %v1088
    %v1090 = vpop.f32.mrb[0].mxu0
    %1091 = vmatprep.mubr.bf16.mxu0 0
    %1092 = vmatmul.mubr.bf16.gmra.mrb[0].mxu0 %v1018
    %v1093 = vpop.f32.mrb[0].mxu0
    %v1094 = vadd.f32 0.0, %v1093
    %v1095 = vpop.f32.mrb[0].mxu0
    %v1096 = vpop.f32.mrb[0].mxu0
    %v1097 = vadd.f32 0.0, %v1096
    %v1098 = vpop.f32.mrb[0].mxu0
    %1099 = vmatprep.mubr.bf16.mxu0 0
    %1100 = vmatmul.mubr.bf16.gmra.mrb[0].mxu0 %v1021
    %v1101 = vpop.f32.mrb[0].mxu0
    %v1102 = vadd.f32 0.0, %v1101
    %v1103 = vpop.f32.mrb[0].mxu0
    %v1104 = vpop.f32.mrb[0].mxu0
    %v1105 = vadd.f32 0.0, %v1104
    %v1106 = vpop.f32.mrb[0].mxu0
    %1107 = vmatprep.mubr.bf16.mxu0 0
    %1108 = vmatmul.mubr.bf16.gmra.mrb[0].mxu0 %v1024
    %v1109 = vpop.f32.mrb[0].mxu0
    %v1110 = vadd.f32 0.0, %v1109
    %v1111 = vpop.f32.mrb[0].mxu0
    %v1112 = vpop.f32.mrb[0].mxu0
    %v1113 = vadd.f32 0.0, %v1112
    %v1114 = vpop.f32.mrb[0].mxu0
    %1115 = vmatprep.mubr.bf16.mxu0 0
    %1116 = vmatmul.mubr.bf16.gmra.mrb[0].mxu0 %v1027
    %v1117 = vpop.f32.mrb[0].mxu0
    %v1118 = vadd.f32 0.0, %v1117
    %v1119 = vpop.f32.mrb[0].mxu0
    %v1120 = vpop.f32.mrb[0].mxu0
    %v1121 = vadd.f32 0.0, %v1120
    %v1122 = vpop.f32.mrb[0].mxu0
    %1123 = vmatprep.mubr.bf16.mxu0 0
    %1124 = vmatmul.mubr.bf16.gmra.mrb[0].mxu0 %v1030
    %v1125 = vpop.f32.mrb[0].mxu0
    %v1126 = vadd.f32 0.0, %v1125
    %v1127 = vpop.f32.mrb[0].mxu0
    %v1128 = vpop.f32.mrb[0].mxu0
    %v1129 = vadd.f32 0.0, %v1128
    %v1130 = vpop.f32.mrb[0].mxu0
    %1131 = vdwg.mxu0
    %v1132 = vpack.c.bf16 %v653, %v650
    %v1133 = vpack.c.bf16 %v661, %v658
    %v1134 = vpack.c.bf16 %v669, %v666
    %v1135 = vpack.c.bf16 %v677, %v674
    %v1136 = vpack.c.bf16 %v685, %v682
    %v1137 = vpack.c.bf16 %v693, %v690
    %v1138 = vpack.c.bf16 %v701, %v698
    %v1139 = vpack.c.bf16 %v709, %v706
    %v1140 = vpack.c.bf16 %v793, %v790
    %v1141 = vpack.c.bf16 %v801, %v798
    %v1142 = vpack.c.bf16 %v809, %v806
    %v1143 = vpack.c.bf16 %v817, %v814
    %v1144 = vpack.c.bf16 %v825, %v822
    %v1145 = vpack.c.bf16 %v833, %v830
    %v1146 = vpack.c.bf16 %v841, %v838
    %v1147 = vpack.c.bf16 %v849, %v846
    %v1148 = vpack.c.bf16 %v933, %v930
    %v1149 = vpack.c.bf16 %v941, %v938
    %v1150 = vpack.c.bf16 %v949, %v946
    %v1151 = vpack.c.bf16 %v957, %v954
    %v1152 = vpack.c.bf16 %v965, %v962
    %v1153 = vpack.c.bf16 %v973, %v970
    %v1154 = vpack.c.bf16 %v981, %v978
    %v1155 = vpack.c.bf16 %v989, %v986
    %v1156 = vpack.c.bf16 %v1073, %v1070
    %v1157 = vpack.c.bf16 %v1081, %v1078
    %v1158 = vpack.c.bf16 %v1089, %v1086
    %v1159 = vpack.c.bf16 %v1097, %v1094
    %v1160 = vpack.c.bf16 %v1105, %v1102
    %v1161 = vpack.c.bf16 %v1113, %v1110
    %v1162 = vpack.c.bf16 %v1121, %v1118
    %v1163 = vpack.c.bf16 %v1129, %v1126
    %v1180 = vunpack.c.l.b16 %v218
    %v1181 = vunpack.c.l.b16 %v219
    %v1182 = vunpack.c.l.b16 %v220
    %v1183 = vunpack.c.l.b16 %v221
    %v1184 = vunpack.c.l.b16 %v222
    %v1185 = vunpack.c.l.b16 %v223
    %v1186 = vunpack.c.l.b16 %v224
    %v1187 = vunpack.c.l.b16 %v225
    %v1188 = vunpack.c.l.b16 %v226
    %v1189 = vunpack.c.l.b16 %v227
    %v1190 = vunpack.c.l.b16 %v228
    %v1191 = vunpack.c.l.b16 %v229
    %v1192 = vunpack.c.l.b16 %v230
    %v1193 = vunpack.c.l.b16 %v231
    %v1194 = vunpack.c.l.b16 %v232
    %v1195 = vunpack.c.l.b16 %v233
    %v1196 = vpack.c.b16 %v1181, %v1180
    %v1197 = vpack.c.b16 %v1183, %v1182
    %v1198 = vpack.c.b16 %v1185, %v1184
    %v1199 = vpack.c.b16 %v1187, %v1186
    %v1200 = vpack.c.b16 %v1189, %v1188
    %v1201 = vpack.c.b16 %v1191, %v1190
    %v1202 = vpack.c.b16 %v1193, %v1192
    %v1203 = vpack.c.b16 %v1195, %v1194
    %v1212 = vmul.bf16 %v1132, %v1196
    %v1213 = vmul.bf16 %v1133, %v1197
    %v1214 = vmul.bf16 %v1134, %v1198
    %v1215 = vmul.bf16 %v1135, %v1199
    %v1216 = vmul.bf16 %v1136, %v1200
    %v1217 = vmul.bf16 %v1137, %v1201
    %v1218 = vmul.bf16 %v1138, %v1202
    %v1219 = vmul.bf16 %v1139, %v1203
    %v1220 = vmul.bf16 %v1140, %v1196
    %v1221 = vmul.bf16 %v1141, %v1197
    %v1222 = vmul.bf16 %v1142, %v1198
    %v1223 = vmul.bf16 %v1143, %v1199
    %v1224 = vmul.bf16 %v1144, %v1200
    %v1225 = vmul.bf16 %v1145, %v1201
    %v1226 = vmul.bf16 %v1146, %v1202
    %v1227 = vmul.bf16 %v1147, %v1203
    %v1228 = vmul.bf16 %v1148, %v1196
    %v1229 = vmul.bf16 %v1149, %v1197
    %v1230 = vmul.bf16 %v1150, %v1198
    %v1231 = vmul.bf16 %v1151, %v1199
    %v1232 = vmul.bf16 %v1152, %v1200
    %v1233 = vmul.bf16 %v1153, %v1201
    %v1234 = vmul.bf16 %v1154, %v1202
    %v1235 = vmul.bf16 %v1155, %v1203
    %v1236 = vmul.bf16 %v1156, %v1196
    %v1237 = vmul.bf16 %v1157, %v1197
    %v1238 = vmul.bf16 %v1158, %v1198
    %v1239 = vmul.bf16 %v1159, %v1199
    %v1240 = vmul.bf16 %v1160, %v1200
    %v1241 = vmul.bf16 %v1161, %v1201
    %v1242 = vmul.bf16 %v1162, %v1202
    %v1243 = vmul.bf16 %v1163, %v1203
    %v1244 = vpack.c.bf16 %v534, %v534
    %v1245 = vpack.c.bf16 %v535, %v535
    %v1246 = vpack.c.bf16 %v536, %v536
    %v1247 = vpack.c.bf16 %v537, %v537
    %1248 = vmatprep.subr.bf16.mxu0 0
    %1249 = vmatpush1.bf16.msra.mxu0 %v1212
    %1250 = vmatprep.subr.bf16.mxu0 0
    %1251 = vmatpush1.bf16.msra.mxu0 %v1213
    %1252 = vmatprep.subr.bf16.mxu0 0
    %1253 = vmatpush1.bf16.msra.mxu0 %v1214
    %1254 = vmatprep.subr.bf16.mxu0 0
    %1255 = vmatpush1.bf16.msra.mxu0 %v1215
    %1256 = vmatprep.subr.bf16.mxu0 0
    %1257 = vmatpush1.bf16.msra.mxu0 %v1216
    %1258 = vmatprep.subr.bf16.mxu0 0
    %1259 = vmatpush1.bf16.msra.mxu0 %v1217
    %1260 = vmatprep.subr.bf16.mxu0 0
    %1261 = vmatpush1.bf16.msra.mxu0 %v1218
    %1262 = vmatprep.subr.bf16.mxu0 0
    %1263 = vmatpush1.bf16.msra.mxu0 %v1219
    %1264 = vmatprep.subr.bf16.mxu0 0
    %1265 = vmatpush1.bf16.msra.mxu0 0
    %1266 = vmatprep.subr.bf16.mxu0 0
    %1267 = vmatpush1.bf16.msra.mxu0 0
    %1268 = vmatprep.subr.bf16.mxu0 0
    %1269 = vmatpush1.bf16.msra.mxu0 0
    %1270 = vmatprep.subr.bf16.mxu0 0
    %1271 = vmatpush1.bf16.msra.mxu0 0
    %1272 = vmatprep.subr.bf16.mxu0 0
    %1273 = vmatpush1.bf16.msra.mxu0 0
    %1274 = vmatprep.subr.bf16.mxu0 0
    %1275 = vmatpush1.bf16.msra.mxu0 0
    %1276 = vmatprep.subr.bf16.mxu0 0
    %1277 = vmatpush1.bf16.msra.mxu0 0
    %1278 = vmatprep.subr.bf16.mxu0 0
    %1279 = vmatpush1.bf16.msra.mxu0 0
    %1280 = vmatprep.mubr.bf16.mxu0 0
    %1281 = vmatmul.mubr.bf16.gmra.mrb[0].mxu0 %v1244
    %v1282 = vpop.f32.mrb[0].mxu0
    %v1283 = vadd.f32 0.0, %v1282
    %v1284 = vpop.f32.mrb[0].mxu0
    %v1285 = vpop.f32.mrb[0].mxu0
    %v1286 = vpop.f32.mrb[0].mxu0
    %1287 = vdwg.mxu0
    %1288 = vmatprep.subr.bf16.mxu0 0
    %1289 = vmatpush1.bf16.msra.mxu0 %v1220
    %1290 = vmatprep.subr.bf16.mxu0 0
    %1291 = vmatpush1.bf16.msra.mxu0 %v1221
    %1292 = vmatprep.subr.bf16.mxu0 0
    %1293 = vmatpush1.bf16.msra.mxu0 %v1222
    %1294 = vmatprep.subr.bf16.mxu0 0
    %1295 = vmatpush1.bf16.msra.mxu0 %v1223
    %1296 = vmatprep.subr.bf16.mxu0 0
    %1297 = vmatpush1.bf16.msra.mxu0 %v1224
    %1298 = vmatprep.subr.bf16.mxu0 0
    %1299 = vmatpush1.bf16.msra.mxu0 %v1225
    %1300 = vmatprep.subr.bf16.mxu0 0
    %1301 = vmatpush1.bf16.msra.mxu0 %v1226
    %1302 = vmatprep.subr.bf16.mxu0 0
    %1303 = vmatpush1.bf16.msra.mxu0 %v1227
    %1304 = vmatprep.subr.bf16.mxu0 0
    %1305 = vmatpush1.bf16.msra.mxu0 0
    %1306 = vmatprep.subr.bf16.mxu0 0
    %1307 = vmatpush1.bf16.msra.mxu0 0
    %1308 = vmatprep.subr.bf16.mxu0 0
    %1309 = vmatpush1.bf16.msra.mxu0 0
    %1310 = vmatprep.subr.bf16.mxu0 0
    %1311 = vmatpush1.bf16.msra.mxu0 0
    %1312 = vmatprep.subr.bf16.mxu0 0
    %1313 = vmatpush1.bf16.msra.mxu0 0
    %1314 = vmatprep.subr.bf16.mxu0 0
    %1315 = vmatpush1.bf16.msra.mxu0 0
    %1316 = vmatprep.subr.bf16.mxu0 0
    %1317 = vmatpush1.bf16.msra.mxu0 0
    %1318 = vmatprep.subr.bf16.mxu0 0
    %1319 = vmatpush1.bf16.msra.mxu0 0
    %1320 = vmatprep.mubr.bf16.mxu0 0
    %1321 = vmatmul.mubr.bf16.gmra.mrb[0].mxu0 %v1245
    %v1322 = vpop.f32.mrb[0].mxu0
    %v1323 = vadd.f32 0.0, %v1322
    %v1324 = vpop.f32.mrb[0].mxu0
    %v1325 = vpop.f32.mrb[0].mxu0
    %v1326 = vpop.f32.mrb[0].mxu0
    %1327 = vdwg.mxu0
    %1328 = vmatprep.subr.bf16.mxu0 0
    %1329 = vmatpush1.bf16.msra.mxu0 %v1228
    %1330 = vmatprep.subr.bf16.mxu0 0
    %1331 = vmatpush1.bf16.msra.mxu0 %v1229
    %1332 = vmatprep.subr.bf16.mxu0 0
    %1333 = vmatpush1.bf16.msra.mxu0 %v1230
    %1334 = vmatprep.subr.bf16.mxu0 0
    %1335 = vmatpush1.bf16.msra.mxu0 %v1231
    %1336 = vmatprep.subr.bf16.mxu0 0
    %1337 = vmatpush1.bf16.msra.mxu0 %v1232
    %1338 = vmatprep.subr.bf16.mxu0 0
    %1339 = vmatpush1.bf16.msra.mxu0 %v1233
    %1340 = vmatprep.subr.bf16.mxu0 0
    %1341 = vmatpush1.bf16.msra.mxu0 %v1234
    %1342 = vmatprep.subr.bf16.mxu0 0
    %1343 = vmatpush1.bf16.msra.mxu0 %v1235
    %1344 = vmatprep.subr.bf16.mxu0 0
    %1345 = vmatpush1.bf16.msra.mxu0 0
    %1346 = vmatprep.subr.bf16.mxu0 0
    %1347 = vmatpush1.bf16.msra.mxu0 0
    %1348 = vmatprep.subr.bf16.mxu0 0
    %1349 = vmatpush1.bf16.msra.mxu0 0
    %1350 = vmatprep.subr.bf16.mxu0 0
    %1351 = vmatpush1.bf16.msra.mxu0 0
    %1352 = vmatprep.subr.bf16.mxu0 0
    %1353 = vmatpush1.bf16.msra.mxu0 0
    %1354 = vmatprep.subr.bf16.mxu0 0
    %1355 = vmatpush1.bf16.msra.mxu0 0
    %1356 = vmatprep.subr.bf16.mxu0 0
    %1357 = vmatpush1.bf16.msra.mxu0 0
    %1358 = vmatprep.subr.bf16.mxu0 0
    %1359 = vmatpush1.bf16.msra.mxu0 0
    %1360 = vmatprep.mubr.bf16.mxu0 0
    %1361 = vmatmul.mubr.bf16.gmra.mrb[0].mxu0 %v1246
    %v1362 = vpop.f32.mrb[0].mxu0
    %v1363 = vadd.f32 0.0, %v1362
    %v1364 = vpop.f32.mrb[0].mxu0
    %v1365 = vpop.f32.mrb[0].mxu0
    %v1366 = vpop.f32.mrb[0].mxu0
    %1367 = vdwg.mxu0
    %1368 = vmatprep.subr.bf16.mxu0 0
    %1369 = vmatpush1.bf16.msra.mxu0 %v1236
    %1370 = vmatprep.subr.bf16.mxu0 0
    %1371 = vmatpush1.bf16.msra.mxu0 %v1237
    %1372 = vmatprep.subr.bf16.mxu0 0
    %1373 = vmatpush1.bf16.msra.mxu0 %v1238
    %1374 = vmatprep.subr.bf16.mxu0 0
    %1375 = vmatpush1.bf16.msra.mxu0 %v1239
    %1376 = vmatprep.subr.bf16.mxu0 0
    %1377 = vmatpush1.bf16.msra.mxu0 %v1240
    %1378 = vmatprep.subr.bf16.mxu0 0
    %1379 = vmatpush1.bf16.msra.mxu0 %v1241
    %1380 = vmatprep.subr.bf16.mxu0 0
    %1381 = vmatpush1.bf16.msra.mxu0 %v1242
    %1382 = vmatprep.subr.bf16.mxu0 0
    %1383 = vmatpush1.bf16.msra.mxu0 %v1243
    %1384 = vmatprep.subr.bf16.mxu0 0
    %1385 = vmatpush1.bf16.msra.mxu0 0
    %1386 = vmatprep.subr.bf16.mxu0 0
    %1387 = vmatpush1.bf16.msra.mxu0 0
    %1388 = vmatprep.subr.bf16.mxu0 0
    %1389 = vmatpush1.bf16.msra.mxu0 0
    %1390 = vmatprep.subr.bf16.mxu0 0
    %1391 = vmatpush1.bf16.msra.mxu0 0
    %1392 = vmatprep.subr.bf16.mxu0 0
    %1393 = vmatpush1.bf16.msra.mxu0 0
    %1394 = vmatprep.subr.bf16.mxu0 0
    %1395 = vmatpush1.bf16.msra.mxu0 0
    %1396 = vmatprep.subr.bf16.mxu0 0
    %1397 = vmatpush1.bf16.msra.mxu0 0
    %1398 = vmatprep.subr.bf16.mxu0 0
    %1399 = vmatpush1.bf16.msra.mxu0 0
    %1400 = vmatprep.mubr.bf16.mxu0 0
    %1401 = vmatmul.mubr.bf16.gmra.mrb[0].mxu0 %v1247
    %v1402 = vpop.f32.mrb[0].mxu0
    %v1403 = vadd.f32 0.0, %v1402
    %v1404 = vpop.f32.mrb[0].mxu0
    %v1405 = vpop.f32.mrb[0].mxu0
    %v1406 = vpop.f32.mrb[0].mxu0
    %1407 = vdwg.mxu0
    %v1408 = vrot.slane %v558, 4
    %v1409 = vadd.f32 %v558, %v1408
    %v1410 = vrot.slane %v1409, 2
    %v1411 = vadd.f32 %v1409, %v1410
    %v1412 = vrot.slane %v1411, 1
    %v1413 = vadd.f32 %v1411, %v1412
    %v1414 = vrot.slane %v559, 4
    %v1415 = vadd.f32 %v559, %v1414
    %v1416 = vrot.slane %v1415, 2
    %v1417 = vadd.f32 %v1415, %v1416
    %v1418 = vrot.slane %v1417, 1
    %v1419 = vadd.f32 %v1417, %v1418
    %v1420 = vrot.slane %v560, 4
    %v1421 = vadd.f32 %v560, %v1420
    %v1422 = vrot.slane %v1421, 2
    %v1423 = vadd.f32 %v1421, %v1422
    %v1424 = vrot.slane %v1423, 1
    %v1425 = vadd.f32 %v1423, %v1424
    %v1426 = vrot.slane %v561, 4
    %v1427 = vadd.f32 %v561, %v1426
    %v1428 = vrot.slane %v1427, 2
    %v1429 = vadd.f32 %v1427, %v1428
    %v1430 = vrot.slane %v1429, 1
    %v1431 = vadd.f32 %v1429, %v1430
    %v1432 = vmul.f32 %v534, %v1413
    %v1433 = vmul.f32 %v535, %v1419
    %v1434 = vmul.f32 %v536, %v1425
    %v1435 = vmul.f32 %v537, %v1431
    %v1436 = vpack.c.bf16 %v1433, %v1432
    %v1437 = vpack.c.bf16 %v1435, %v1434
    %1438 = vmatprep.subr.bf16.mxu0 0
    %1439 = vmatpush1.bf16.msra.mxu0 %v1196
    %1440 = vmatprep.subr.bf16.mxu0 0
    %1441 = vmatpush1.bf16.msra.mxu0 %v1197
    %1442 = vmatprep.subr.bf16.mxu0 0
    %1443 = vmatpush1.bf16.msra.mxu0 %v1198
    %1444 = vmatprep.subr.bf16.mxu0 0
    %1445 = vmatpush1.bf16.msra.mxu0 %v1199
    %1446 = vmatprep.subr.bf16.mxu0 0
    %1447 = vmatpush1.bf16.msra.mxu0 %v1200
    %1448 = vmatprep.subr.bf16.mxu0 0
    %1449 = vmatpush1.bf16.msra.mxu0 %v1201
    %1450 = vmatprep.subr.bf16.mxu0 0
    %1451 = vmatpush1.bf16.msra.mxu0 %v1202
    %1452 = vmatprep.subr.bf16.mxu0 0
    %1453 = vmatpush1.bf16.msra.mxu0 %v1203
    %1454 = vmatprep.subr.bf16.mxu0 0
    %1455 = vmatpush1.bf16.msra.mxu0 0
    %1456 = vmatprep.subr.bf16.mxu0 0
    %1457 = vmatpush1.bf16.msra.mxu0 0
    %1458 = vmatprep.subr.bf16.mxu0 0
    %1459 = vmatpush1.bf16.msra.mxu0 0
    %1460 = vmatprep.subr.bf16.mxu0 0
    %1461 = vmatpush1.bf16.msra.mxu0 0
    %1462 = vmatprep.subr.bf16.mxu0 0
    %1463 = vmatpush1.bf16.msra.mxu0 0
    %1464 = vmatprep.subr.bf16.mxu0 0
    %1465 = vmatpush1.bf16.msra.mxu0 0
    %1466 = vmatprep.subr.bf16.mxu0 0
    %1467 = vmatpush1.bf16.msra.mxu0 0
    %1468 = vmatprep.subr.bf16.mxu0 0
    %1469 = vmatpush1.bf16.msra.mxu0 0
    %1470 = vmatprep.mubr.bf16.mxu0 0
    %1471 = vmatmul.mubr.bf16.gmra.mrb[0].mxu0 %v1436
    %v1472 = vpop.f32.mrb[0].mxu0
    %v1473 = vadd.f32 1e-06, %v1472
    %v1474 = vpop.f32.mrb[0].mxu0
    %v1475 = vpop.f32.mrb[0].mxu0
    %v1476 = vadd.f32 1e-06, %v1475
    %v1477 = vpop.f32.mrb[0].mxu0
    %1478 = vmatprep.mubr.bf16.mxu0 0
    %1479 = vmatmul.mubr.bf16.gmra.mrb[0].mxu0 %v1437
    %v1480 = vpop.f32.mrb[0].mxu0
    %v1481 = vadd.f32 1e-06, %v1480
    %v1482 = vpop.f32.mrb[0].mxu0
    %v1483 = vpop.f32.mrb[0].mxu0
    %v1484 = vadd.f32 1e-06, %v1483
    %v1485 = vpop.f32.mrb[0].mxu0
    %1486 = vdwg.mxu0
    %v1487 = vrcp.pop %v1473
    %v1488 = vrcp.pop %v1476
    %v1489 = vrcp.pop %v1481
    %v1490 = vrcp.pop %v1484
    %v1491 = vmul.f32 %v1283, %v1487
    %v1492 = vmul.f32 %v1323, %v1488
    %v1493 = vmul.f32 %v1363, %v1489
    %v1494 = vmul.f32 %v1403, %v1490
    %v1495 = vpack.c.bf16 %v1492, %v1491
    %v1496 = vpack.c.bf16 %v1494, %v1493
    %v1497 = vld [vmem:[#allocation8] sm:$0xf]
    %v1498 = vld [vmem:[#allocation8 + $0x4] sm:$0xf]
    %v1499 = vld [vmem:[#allocation8 + $0x8] sm:$0xf]
    %v1500 = vld [vmem:[#allocation8 + $0xc] sm:$0xf]
    %v1501 = vld [vmem:[#allocation8 + $0x10] sm:$0xf]
    %v1502 = vld [vmem:[#allocation8 + $0x14] sm:$0xf]
    %v1503 = vld [vmem:[#allocation8 + $0x18] sm:$0xf]
    %v1504 = vld [vmem:[#allocation8 + $0x1c] sm:$0xf]
    %v1505 = vld [vmem:[#allocation8 + $0x20] sm:$0xf]
    %v1506 = vld [vmem:[#allocation8 + $0x24] sm:$0xf]
    %v1507 = vld [vmem:[#allocation8 + $0x28] sm:$0xf]
    %v1508 = vld [vmem:[#allocation8 + $0x2c] sm:$0xf]
    %v1509 = vld [vmem:[#allocation8 + $0x30] sm:$0xf]
    %v1510 = vld [vmem:[#allocation8 + $0x34] sm:$0xf]
    %v1511 = vld [vmem:[#allocation8 + $0x38] sm:$0xf]
    %v1512 = vld [vmem:[#allocation8 + $0x3c] sm:$0xf]
    %v1529 = vunpack.c.l.b16 %v1497
    %v1530 = vunpack.c.l.b16 %v1498
    %v1531 = vunpack.c.l.b16 %v1499
    %v1532 = vunpack.c.l.b16 %v1500
    %v1533 = vunpack.c.l.b16 %v1501
    %v1534 = vunpack.c.l.b16 %v1502
    %v1535 = vunpack.c.l.b16 %v1503
    %v1536 = vunpack.c.l.b16 %v1504
    %v1537 = vunpack.c.l.b16 %v1505
    %v1538 = vunpack.c.l.b16 %v1506
    %v1539 = vunpack.c.l.b16 %v1507
    %v1540 = vunpack.c.l.b16 %v1508
    %v1541 = vunpack.c.l.b16 %v1509
    %v1542 = vunpack.c.l.b16 %v1510
    %v1543 = vunpack.c.l.b16 %v1511
    %v1544 = vunpack.c.l.b16 %v1512
    %v1545 = vpack.c.b16 %v1530, %v1529
    %v1546 = vpack.c.b16 %v1532, %v1531
    %v1547 = vpack.c.b16 %v1534, %v1533
    %v1548 = vpack.c.b16 %v1536, %v1535
    %v1549 = vpack.c.b16 %v1538, %v1537
    %v1550 = vpack.c.b16 %v1540, %v1539
    %v1551 = vpack.c.b16 %v1542, %v1541
    %v1552 = vpack.c.b16 %v1544, %v1543
    %1561 = vmatprep.subr.bf16.mxu0 0
    %1562 = vmatpush1.bf16.msra.mxu0 %v1545
    %1563 = vmatprep.subr.bf16.mxu0 0
    %1564 = vmatpush1.bf16.msra.mxu0 %v1546
    %1565 = vmatprep.subr.bf16.mxu0 0
    %1566 = vmatpush1.bf16.msra.mxu0 %v1547
    %1567 = vmatprep.subr.bf16.mxu0 0
    %1568 = vmatpush1.bf16.msra.mxu0 %v1548
    %1569 = vmatprep.subr.bf16.mxu0 0
    %1570 = vmatpush1.bf16.msra.mxu0 %v1549
    %1571 = vmatprep.subr.bf16.mxu0 0
    %1572 = vmatpush1.bf16.msra.mxu0 %v1550
    %1573 = vmatprep.subr.bf16.mxu0 0
    %1574 = vmatpush1.bf16.msra.mxu0 %v1551
    %1575 = vmatprep.subr.bf16.mxu0 0
    %1576 = vmatpush1.bf16.msra.mxu0 %v1552
    %1577 = vmatprep.subr.bf16.mxu0 0
    %1578 = vmatpush1.bf16.msra.mxu0 0
    %1579 = vmatprep.subr.bf16.mxu0 0
    %1580 = vmatpush1.bf16.msra.mxu0 0
    %1581 = vmatprep.subr.bf16.mxu0 0
    %1582 = vmatpush1.bf16.msra.mxu0 0
    %1583 = vmatprep.subr.bf16.mxu0 0
    %1584 = vmatpush1.bf16.msra.mxu0 0
    %1585 = vmatprep.subr.bf16.mxu0 0
    %1586 = vmatpush1.bf16.msra.mxu0 0
    %1587 = vmatprep.subr.bf16.mxu0 0
    %1588 = vmatpush1.bf16.msra.mxu0 0
    %1589 = vmatprep.subr.bf16.mxu0 0
    %1590 = vmatpush1.bf16.msra.mxu0 0
    %1591 = vmatprep.subr.bf16.mxu0 0
    %1592 = vmatpush1.bf16.msra.mxu0 0
    %1593 = vmatprep.mubr.bf16.mxu0 0
    %1594 = vmatmul.mubr.bf16.gmra.mrb[0].mxu0 %v1495
    %v1595 = vpop.f32.mrb[0].mxu0
    %v1596 = vadd.f32 0.0, %v1595
    %v1597 = vpop.f32.mrb[0].mxu0
    %v1598 = vpop.f32.mrb[0].mxu0
    %v1599 = vadd.f32 0.0, %v1598
    %v1600 = vpop.f32.mrb[0].mxu0
    %1601 = vmatprep.mubr.bf16.mxu0 0
    %1602 = vmatmul.mubr.bf16.gmra.mrb[0].mxu0 %v1496
    %v1603 = vpop.f32.mrb[0].mxu0
    %v1604 = vadd.f32 0.0, %v1603
    %v1605 = vpop.f32.mrb[0].mxu0
    %v1606 = vpop.f32.mrb[0].mxu0
    %v1607 = vadd.f32 0.0, %v1606
    %v1608 = vpop.f32.mrb[0].mxu0
    %1609 = vdwg.mxu0
    %v1610 = vld [vmem:[#allocation13] sm:$0x1]
    %v1611 = vld [vmem:[#allocation14] sm:$0x1]
    %v1612 = vpack.c.bf16 %v1599, %v1596
    %v1613 = vpack.c.bf16 %v1607, %v1604
    %v1630 = vunpack.c.l.b16 %v234
    %v1631 = vunpack.c.l.b16 %v235
    %v1632 = vunpack.c.l.b16 %v236
    %v1633 = vunpack.c.l.b16 %v237
    %v1634 = vunpack.c.l.b16 %v238
    %v1635 = vunpack.c.l.b16 %v239
    %v1636 = vunpack.c.l.b16 %v240
    %v1637 = vunpack.c.l.b16 %v241
    %v1638 = vunpack.c.l.b16 %v242
    %v1639 = vunpack.c.l.b16 %v243
    %v1640 = vunpack.c.l.b16 %v244
    %v1641 = vunpack.c.l.b16 %v245
    %v1642 = vunpack.c.l.b16 %v246
    %v1643 = vunpack.c.l.b16 %v247
    %v1644 = vunpack.c.l.b16 %v248
    %v1645 = vunpack.c.l.b16 %v249
    %v1646 = vpack.c.b16 %v1631, %v1630
    %v1647 = vpack.c.b16 %v1633, %v1632
    %v1648 = vpack.c.b16 %v1635, %v1634
    %v1649 = vpack.c.b16 %v1637, %v1636
    %v1650 = vpack.c.b16 %v1639, %v1638
    %v1651 = vpack.c.b16 %v1641, %v1640
    %v1652 = vpack.c.b16 %v1643, %v1642
    %v1653 = vpack.c.b16 %v1645, %v1644
    %1662 = vmatprep.subr.bf16.mxu0 0
    %1663 = vmatpush1.bf16.msra.mxu0 %v1646
    %1664 = vmatprep.subr.bf16.mxu0 0
    %1665 = vmatpush1.bf16.msra.mxu0 %v1647
    %1666 = vmatprep.subr.bf16.mxu0 0
    %1667 = vmatpush1.bf16.msra.mxu0 %v1648
    %1668 = vmatprep.subr.bf16.mxu0 0
    %1669 = vmatpush1.bf16.msra.mxu0 %v1649
    %1670 = vmatprep.subr.bf16.mxu0 0
    %1671 = vmatpush1.bf16.msra.mxu0 %v1650
    %1672 = vmatprep.subr.bf16.mxu0 0
    %1673 = vmatpush1.bf16.msra.mxu0 %v1651
    %1674 = vmatprep.subr.bf16.mxu0 0
    %1675 = vmatpush1.bf16.msra.mxu0 %v1652
    %1676 = vmatprep.subr.bf16.mxu0 0
    %1677 = vmatpush1.bf16.msra.mxu0 %v1653
    %1678 = vmatprep.subr.bf16.mxu0 0
    %1679 = vmatpush1.bf16.msra.mxu0 0
    %1680 = vmatprep.subr.bf16.mxu0 0
    %1681 = vmatpush1.bf16.msra.mxu0 0
    %1682 = vmatprep.subr.bf16.mxu0 0
    %1683 = vmatpush1.bf16.msra.mxu0 0
    %1684 = vmatprep.subr.bf16.mxu0 0
    %1685 = vmatpush1.bf16.msra.mxu0 0
    %1686 = vmatprep.subr.bf16.mxu0 0
    %1687 = vmatpush1.bf16.msra.mxu0 0
    %1688 = vmatprep.subr.bf16.mxu0 0
    %1689 = vmatpush1.bf16.msra.mxu0 0
    %1690 = vmatprep.subr.bf16.mxu0 0
    %1691 = vmatpush1.bf16.msra.mxu0 0
    %1692 = vmatprep.subr.bf16.mxu0 0
    %1693 = vmatpush1.bf16.msra.mxu0 0
    %1694 = vmatprep.mubr.bf16.mxu0 0
    %1695 = vmatmul.mubr.bf16.gmra.mrb[0].mxu0 %v1612
    %v1696 = vpop.f32.mrb[0].mxu0
    %v1697 = vadd.f32 0.0, %v1696
    %v1698 = vpop.f32.mrb[0].mxu0
    %v1699 = vpop.f32.mrb[0].mxu0
    %v1700 = vadd.f32 0.0, %v1699
    %v1701 = vpop.f32.mrb[0].mxu0
    %1702 = vmatprep.mubr.bf16.mxu0 0
    %1703 = vmatmul.mubr.bf16.gmra.mrb[0].mxu0 %v1613
    %v1704 = vpop.f32.mrb[0].mxu0
    %v1705 = vadd.f32 0.0, %v1704
    %v1706 = vpop.f32.mrb[0].mxu0
    %v1707 = vpop.f32.mrb[0].mxu0
    %v1708 = vadd.f32 0.0, %v1707
    %v1709 = vpop.f32.mrb[0].mxu0
    %1710 = vdwg.mxu0
    %v1711 = vmul.f32 %v1697, 0.015625
    %v1712 = vmul.f32 %v1700, 0.015625
    %v1713 = vmul.f32 %v1705, 0.015625
    %v1714 = vmul.f32 %v1708, 0.015625
    %v1715 = vsub.f32 %v1596, %v1711
    %v1716 = vsub.f32 %v1599, %v1712
    %v1717 = vsub.f32 %v1604, %v1713
    %v1718 = vsub.f32 %v1607, %v1714
    %v1719 = vmul.f32 %v1715, %v1715
    %v1720 = vmul.f32 %v1716, %v1716
    %v1721 = vmul.f32 %v1717, %v1717
    %v1722 = vmul.f32 %v1718, %v1718
    %v1723 = vpack.c.bf16 %v1720, %v1719
    %v1724 = vpack.c.bf16 %v1722, %v1721
    %1725 = vmatprep.subr.bf16.mxu0 0
    %1726 = vmatpush1.bf16.msra.mxu0 %v1646
    %1727 = vmatprep.subr.bf16.mxu0 0
    %1728 = vmatpush1.bf16.msra.mxu0 %v1647
    %1729 = vmatprep.subr.bf16.mxu0 0
    %1730 = vmatpush1.bf16.msra.mxu0 %v1648
    %1731 = vmatprep.subr.bf16.mxu0 0
    %1732 = vmatpush1.bf16.msra.mxu0 %v1649
    %1733 = vmatprep.subr.bf16.mxu0 0
    %1734 = vmatpush1.bf16.msra.mxu0 %v1650
    %1735 = vmatprep.subr.bf16.mxu0 0
    %1736 = vmatpush1.bf16.msra.mxu0 %v1651
    %1737 = vmatprep.subr.bf16.mxu0 0
    %1738 = vmatpush1.bf16.msra.mxu0 %v1652
    %1739 = vmatprep.subr.bf16.mxu0 0
    %1740 = vmatpush1.bf16.msra.mxu0 %v1653
    %1741 = vmatprep.subr.bf16.mxu0 0
    %1742 = vmatpush1.bf16.msra.mxu0 0
    %1743 = vmatprep.subr.bf16.mxu0 0
    %1744 = vmatpush1.bf16.msra.mxu0 0
    %1745 = vmatprep.subr.bf16.mxu0 0
    %1746 = vmatpush1.bf16.msra.mxu0 0
    %1747 = vmatprep.subr.bf16.mxu0 0
    %1748 = vmatpush1.bf16.msra.mxu0 0
    %1749 = vmatprep.subr.bf16.mxu0 0
    %1750 = vmatpush1.bf16.msra.mxu0 0
    %1751 = vmatprep.subr.bf16.mxu0 0
    %1752 = vmatpush1.bf16.msra.mxu0 0
    %1753 = vmatprep.subr.bf16.mxu0 0
    %1754 = vmatpush1.bf16.msra.mxu0 0
    %1755 = vmatprep.subr.bf16.mxu0 0
    %1756 = vmatpush1.bf16.msra.mxu0 0
    %1757 = vmatprep.mubr.bf16.mxu0 0
    %1758 = vmatmul.mubr.bf16.gmra.mrb[0].mxu0 %v1723
    %v1759 = vpop.f32.mrb[0].mxu0
    %v1760 = vadd.f32 0.0, %v1759
    %v1761 = vpop.f32.mrb[0].mxu0
    %v1762 = vpop.f32.mrb[0].mxu0
    %v1763 = vadd.f32 0.0, %v1762
    %v1764 = vpop.f32.mrb[0].mxu0
    %1765 = vmatprep.mubr.bf16.mxu0 0
    %1766 = vmatmul.mubr.bf16.gmra.mrb[0].mxu0 %v1724
    %v1767 = vpop.f32.mrb[0].mxu0
    %v1768 = vadd.f32 0.0, %v1767
    %v1769 = vpop.f32.mrb[0].mxu0
    %v1770 = vpop.f32.mrb[0].mxu0
    %v1771 = vadd.f32 0.0, %v1770
    %v1772 = vpop.f32.mrb[0].mxu0
    %1773 = vdwg.mxu0
    %v1774 = vmul.f32 %v1760, 0.015625
    %v1775 = vmul.f32 %v1763, 0.015625
    %v1776 = vmul.f32 %v1768, 0.015625
    %v1777 = vmul.f32 %v1771, 0.015625
    %v1778 = vadd.f32 %v1774, 1e-05
    %v1779 = vadd.f32 %v1775, 1e-05
    %v1780 = vadd.f32 %v1776, 1e-05
    %v1781 = vadd.f32 %v1777, 1e-05
    %v1782 = vrsqrt.pop %v1778
    %v1783 = vrsqrt.pop %v1779
    %v1784 = vrsqrt.pop %v1780
    %v1785 = vrsqrt.pop %v1781
    %v1786 = vmul.f32 %v1715, %v1782
    %v1787 = vmul.f32 %v1716, %v1783
    %v1788 = vmul.f32 %v1717, %v1784
    %v1789 = vmul.f32 %v1718, %v1785
    %v1791 = vlaneseq
    %v1792 = vshrl.u32 %v1791, 7
    %v1793 = vsub.s32 0, %v1792
    %v1794 = vrot.slane %v1610, %v1793
    %v1796 = vmul.f32 %v1786, %v1794
    %v1797 = vmul.f32 %v1787, %v1794
    %v1798 = vmul.f32 %v1788, %v1794
    %v1799 = vmul.f32 %v1789, %v1794
    %v1801 = vlaneseq
    %v1802 = vshrl.u32 %v1801, 7
    %v1803 = vsub.s32 0, %v1802
    %v1804 = vrot.slane %v1611, %v1803
    %v1806 = vadd.f32 %v1796, %v1804
    %v1807 = vadd.f32 %v1797, %v1804
    %v1808 = vadd.f32 %v1798, %v1804
    %v1809 = vadd.f32 %v1799, %v1804
    %v1810 = vld [vmem:[#allocation16] sm:$0xff]
    %v1811 = vld [vmem:[#allocation16 + $0x8] sm:$0xff]
    %v1812 = vld [vmem:[#allocation16 + $0x10] sm:$0xff]
    %v1813 = vld [vmem:[#allocation16 + $0x18] sm:$0xff]
    %v1814 = vld [vmem:[#allocation16 + $0x20] sm:$0xff]
    %v1815 = vld [vmem:[#allocation16 + $0x28] sm:$0xff]
    %v1816 = vld [vmem:[#allocation16 + $0x30] sm:$0xff]
    %v1817 = vld [vmem:[#allocation16 + $0x38] sm:$0xff]
    %v1818 = vld [vmem:[#allocation16 + $0x40] sm:$0xff]
    %v1819 = vld [vmem:[#allocation16 + $0x48] sm:$0xff]
    %v1820 = vld [vmem:[#allocation16 + $0x50] sm:$0xff]
    %v1821 = vld [vmem:[#allocation16 + $0x58] sm:$0xff]
    %v1822 = vld [vmem:[#allocation16 + $0x60] sm:$0xff]
    %v1823 = vld [vmem:[#allocation16 + $0x68] sm:$0xff]
    %v1824 = vld [vmem:[#allocation16 + $0x70] sm:$0xff]
    %v1825 = vld [vmem:[#allocation16 + $0x78] sm:$0xff]
    %v1826 = vpack.c.bf16 %v1807, %v1806
    %v1827 = vpack.c.bf16 %v1809, %v1808
    %v1828 = vld [vmem:[#allocation17] sm:$0xff]
    %v1829 = vld [vmem:[#allocation17 + $0x8] sm:$0xff]
    %v1830 = vld [vmem:[#allocation17 + $0x10] sm:$0xff]
    %v1831 = vld [vmem:[#allocation17 + $0x18] sm:$0xff]
    %v1832 = vld [vmem:[#allocation17 + $0x20] sm:$0xff]
    %v1833 = vld [vmem:[#allocation17 + $0x28] sm:$0xff]
    %v1834 = vld [vmem:[#allocation17 + $0x30] sm:$0xff]
    %v1835 = vld [vmem:[#allocation17 + $0x38] sm:$0xff]
    %v1836 = vld [vmem:[#allocation17 + $0x40] sm:$0xff]
    %v1837 = vld [vmem:[#allocation17 + $0x48] sm:$0xff]
    %v1838 = vld [vmem:[#allocation17 + $0x50] sm:$0xff]
    %v1839 = vld [vmem:[#allocation17 + $0x58] sm:$0xff]
    %v1840 = vld [vmem:[#allocation17 + $0x60] sm:$0xff]
    %v1841 = vld [vmem:[#allocation17 + $0x68] sm:$0xff]
    %v1842 = vld [vmem:[#allocation17 + $0x70] sm:$0xff]
    %v1843 = vld [vmem:[#allocation17 + $0x78] sm:$0xff]
    %v1860 = vunpack.c.l.b16 %v1828
    %v1861 = vunpack.c.h.b16 %v1828
    %v1862 = vunpack.c.l.b16 %v1829
    %v1863 = vunpack.c.h.b16 %v1829
    %v1864 = vunpack.c.l.b16 %v1830
    %v1865 = vunpack.c.h.b16 %v1830
    %v1866 = vunpack.c.l.b16 %v1831
    %v1867 = vunpack.c.h.b16 %v1831
    %v1868 = vunpack.c.l.b16 %v1832
    %v1869 = vunpack.c.h.b16 %v1832
    %v1870 = vunpack.c.l.b16 %v1833
    %v1871 = vunpack.c.h.b16 %v1833
    %v1872 = vunpack.c.l.b16 %v1834
    %v1873 = vunpack.c.h.b16 %v1834
    %v1874 = vunpack.c.l.b16 %v1835
    %v1875 = vunpack.c.h.b16 %v1835
    %v1876 = vunpack.c.l.b16 %v1836
    %v1877 = vunpack.c.h.b16 %v1836
    %v1878 = vunpack.c.l.b16 %v1837
    %v1879 = vunpack.c.h.b16 %v1837
    %v1880 = vunpack.c.l.b16 %v1838
    %v1881 = vunpack.c.h.b16 %v1838
    %v1882 = vunpack.c.l.b16 %v1839
    %v1883 = vunpack.c.h.b16 %v1839
    %v1884 = vunpack.c.l.b16 %v1840
    %v1885 = vunpack.c.h.b16 %v1840
    %v1886 = vunpack.c.l.b16 %v1841
    %v1887 = vunpack.c.h.b16 %v1841
    %v1888 = vunpack.c.l.b16 %v1842
    %v1889 = vunpack.c.h.b16 %v1842
    %v1890 = vunpack.c.l.b16 %v1843
    %v1891 = vunpack.c.h.b16 %v1843
    %v1892 = vpack.c.b16 %v1862, %v1860
    %v1893 = vpack.c.b16 %v1863, %v1861
    %v1894 = vpack.c.b16 %v1866, %v1864
    %v1895 = vpack.c.b16 %v1867, %v1865
    %v1896 = vpack.c.b16 %v1870, %v1868
    %v1897 = vpack.c.b16 %v1871, %v1869
    %v1898 = vpack.c.b16 %v1874, %v1872
    %v1899 = vpack.c.b16 %v1875, %v1873
    %v1900 = vpack.c.b16 %v1878, %v1876
    %v1901 = vpack.c.b16 %v1879, %v1877
    %v1902 = vpack.c.b16 %v1882, %v1880
    %v1903 = vpack.c.b16 %v1883, %v1881
    %v1904 = vpack.c.b16 %v1886, %v1884
    %v1905 = vpack.c.b16 %v1887, %v1885
    %v1906 = vpack.c.b16 %v1890, %v1888
    %v1907 = vpack.c.b16 %v1891, %v1889
    %1924 = vmatprep.subr.bf16.mxu0 %v1893
    %1925 = vmatpush1.bf16.msra.mxu0 %v1892
    %1926 = vmatprep.subr.bf16.mxu0 %v1895
    %1927 = vmatpush1.bf16.msra.mxu0 %v1894
    %1928 = vmatprep.subr.bf16.mxu0 %v1897
    %1929 = vmatpush1.bf16.msra.mxu0 %v1896
    %1930 = vmatprep.subr.bf16.mxu0 %v1899
    %1931 = vmatpush1.bf16.msra.mxu0 %v1898
    %1932 = vmatprep.subr.bf16.mxu0 %v1901
    %1933 = vmatpush1.bf16.msra.mxu0 %v1900
    %1934 = vmatprep.subr.bf16.mxu0 %v1903
    %1935 = vmatpush1.bf16.msra.mxu0 %v1902
    %1936 = vmatprep.subr.bf16.mxu0 %v1905
    %1937 = vmatpush1.bf16.msra.mxu0 %v1904
    %1938 = vmatprep.subr.bf16.mxu0 %v1907
    %1939 = vmatpush1.bf16.msra.mxu0 %v1906
    %1940 = vmatprep.subr.bf16.mxu0 0
    %1941 = vmatpush1.bf16.msra.mxu0 0
    %1942 = vmatprep.subr.bf16.mxu0 0
    %1943 = vmatpush1.bf16.msra.mxu0 0
    %1944 = vmatprep.subr.bf16.mxu0 0
    %1945 = vmatpush1.bf16.msra.mxu0 0
    %1946 = vmatprep.subr.bf16.mxu0 0
    %1947 = vmatpush1.bf16.msra.mxu0 0
    %1948 = vmatprep.subr.bf16.mxu0 0
    %1949 = vmatpush1.bf16.msra.mxu0 0
    %1950 = vmatprep.subr.bf16.mxu0 0
    %1951 = vmatpush1.bf16.msra.mxu0 0
    %1952 = vmatprep.subr.bf16.mxu0 0
    %1953 = vmatpush1.bf16.msra.mxu0 0
    %1954 = vmatprep.subr.bf16.mxu0 0
    %1955 = vmatpush1.bf16.msra.mxu0 0
    %1956 = vmatprep.mubr.bf16.mxu0 0
    %1957 = vmatmul.mubr.bf16.gmra.mrb[0].mxu0 %v1826
    %v1958 = vpop.f32.mrb[0].mxu0
    %v1959 = vadd.f32 0.0, %v1958
    %v1960 = vpop.f32.mrb[0].mxu0
    %v1961 = vadd.f32 0.0, %v1960
    %v1962 = vpop.f32.mrb[0].mxu0
    %v1963 = vadd.f32 0.0, %v1962
    %v1964 = vpop.f32.mrb[0].mxu0
    %v1965 = vadd.f32 0.0, %v1964
    %1966 = vmatprep.mubr.bf16.mxu0 0
    %1967 = vmatmul.mubr.bf16.gmra.mrb[0].mxu0 %v1827
    %v1968 = vpop.f32.mrb[0].mxu0
    %v1969 = vadd.f32 0.0, %v1968
    %v1970 = vpop.f32.mrb[0].mxu0
    %v1971 = vadd.f32 0.0, %v1970
    %v1972 = vpop.f32.mrb[0].mxu0
    %v1973 = vadd.f32 0.0, %v1972
    %v1974 = vpop.f32.mrb[0].mxu0
    %v1975 = vadd.f32 0.0, %v1974
    %1976 = vdwg.mxu0
    %v1993 = vunpack.c.l.b16 %v1810
    %v1994 = vunpack.c.h.b16 %v1810
    %v1995 = vunpack.c.l.b16 %v1811
    %v1996 = vunpack.c.h.b16 %v1811
    %v1997 = vunpack.c.l.b16 %v1812
    %v1998 = vunpack.c.h.b16 %v1812
    %v1999 = vunpack.c.l.b16 %v1813
    %v2000 = vunpack.c.h.b16 %v1813
    %v2001 = vunpack.c.l.b16 %v1814
    %v2002 = vunpack.c.h.b16 %v1814
    %v2003 = vunpack.c.l.b16 %v1815
    %v2004 = vunpack.c.h.b16 %v1815
    %v2005 = vunpack.c.l.b16 %v1816
    %v2006 = vunpack.c.h.b16 %v1816
    %v2007 = vunpack.c.l.b16 %v1817
    %v2008 = vunpack.c.h.b16 %v1817
    %v2009 = vunpack.c.l.b16 %v1818
    %v2010 = vunpack.c.h.b16 %v1818
    %v2011 = vunpack.c.l.b16 %v1819
    %v2012 = vunpack.c.h.b16 %v1819
    %v2013 = vunpack.c.l.b16 %v1820
    %v2014 = vunpack.c.h.b16 %v1820
    %v2015 = vunpack.c.l.b16 %v1821
    %v2016 = vunpack.c.h.b16 %v1821
    %v2017 = vunpack.c.l.b16 %v1822
    %v2018 = vunpack.c.h.b16 %v1822
    %v2019 = vunpack.c.l.b16 %v1823
    %v2020 = vunpack.c.h.b16 %v1823
    %v2021 = vunpack.c.l.b16 %v1824
    %v2022 = vunpack.c.h.b16 %v1824
    %v2023 = vunpack.c.l.b16 %v1825
    %v2024 = vunpack.c.h.b16 %v1825
    %v2025 = vpack.c.b16 %v1995, %v1993
    %v2026 = vpack.c.b16 %v1996, %v1994
    %v2027 = vpack.c.b16 %v1999, %v1997
    %v2028 = vpack.c.b16 %v2000, %v1998
    %v2029 = vpack.c.b16 %v2003, %v2001
    %v2030 = vpack.c.b16 %v2004, %v2002
    %v2031 = vpack.c.b16 %v2007, %v2005
    %v2032 = vpack.c.b16 %v2008, %v2006
    %v2033 = vpack.c.b16 %v2011, %v2009
    %v2034 = vpack.c.b16 %v2012, %v2010
    %v2035 = vpack.c.b16 %v2015, %v2013
    %v2036 = vpack.c.b16 %v2016, %v2014
    %v2037 = vpack.c.b16 %v2019, %v2017
    %v2038 = vpack.c.b16 %v2020, %v2018
    %v2039 = vpack.c.b16 %v2023, %v2021
    %v2040 = vpack.c.b16 %v2024, %v2022
    %2057 = vmatprep.subr.bf16.mxu0 %v2026
    %2058 = vmatpush1.bf16.msra.mxu0 %v2025
    %2059 = vmatprep.subr.bf16.mxu0 %v2028
    %2060 = vmatpush1.bf16.msra.mxu0 %v2027
    %2061 = vmatprep.subr.bf16.mxu0 %v2030
    %2062 = vmatpush1.bf16.msra.mxu0 %v2029
    %2063 = vmatprep.subr.bf16.mxu0 %v2032
    %2064 = vmatpush1.bf16.msra.mxu0 %v2031
    %2065 = vmatprep.subr.bf16.mxu0 %v2034
    %2066 = vmatpush1.bf16.msra.mxu0 %v2033
    %2067 = vmatprep.subr.bf16.mxu0 %v2036
    %2068 = vmatpush1.bf16.msra.mxu0 %v2035
    %2069 = vmatprep.subr.bf16.mxu0 %v2038
    %2070 = vmatpush1.bf16.msra.mxu0 %v2037
    %2071 = vmatprep.subr.bf16.mxu0 %v2040
    %2072 = vmatpush1.bf16.msra.mxu0 %v2039
    %2073 = vmatprep.subr.bf16.mxu0 0
    %2074 = vmatpush1.bf16.msra.mxu0 0
    %2075 = vmatprep.subr.bf16.mxu0 0
    %2076 = vmatpush1.bf16.msra.mxu0 0
    %2077 = vmatprep.subr.bf16.mxu0 0
    %2078 = vmatpush1.bf16.msra.mxu0 0
    %2079 = vmatprep.subr.bf16.mxu0 0
    %2080 = vmatpush1.bf16.msra.mxu0 0
    %2081 = vmatprep.subr.bf16.mxu0 0
    %2082 = vmatpush1.bf16.msra.mxu0 0
    %2083 = vmatprep.subr.bf16.mxu0 0
    %2084 = vmatpush1.bf16.msra.mxu0 0
    %2085 = vmatprep.subr.bf16.mxu0 0
    %2086 = vmatpush1.bf16.msra.mxu0 0
    %2087 = vmatprep.subr.bf16.mxu0 0
    %2088 = vmatpush1.bf16.msra.mxu0 0
    %2089 = vmatprep.mubr.bf16.mxu0 0
    %2090 = vmatmul.mubr.bf16.gmra.mrb[0].mxu0 %v250
    %v2091 = vpop.f32.mrb[0].mxu0
    %v2092 = vadd.f32 %v1959, %v2091
    %v2093 = vpop.f32.mrb[0].mxu0
    %v2094 = vadd.f32 %v1961, %v2093
    %v2095 = vpop.f32.mrb[0].mxu0
    %v2096 = vadd.f32 %v1963, %v2095
    %v2097 = vpop.f32.mrb[0].mxu0
    %v2098 = vadd.f32 %v1965, %v2097
    %2099 = vmatprep.mubr.bf16.mxu0 0
    %2100 = vmatmul.mubr.bf16.gmra.mrb[0].mxu0 %v251
    %v2101 = vpop.f32.mrb[0].mxu0
    %v2102 = vadd.f32 %v1969, %v2101
    %v2103 = vpop.f32.mrb[0].mxu0
    %v2104 = vadd.f32 %v1971, %v2103
    %v2105 = vpop.f32.mrb[0].mxu0
    %v2106 = vadd.f32 %v1973, %v2105
    %v2107 = vpop.f32.mrb[0].mxu0
    %v2108 = vadd.f32 %v1975, %v2107
    %2109 = vdwg.mxu0
    %v2110 = vmax.f32 %v2092, 0.0
    %v2111 = vmax.f32 %v2094, 0.0
    %v2112 = vmax.f32 %v2096, 0.0
    %v2113 = vmax.f32 %v2098, 0.0
    %v2114 = vmax.f32 %v2102, 0.0
    %v2115 = vmax.f32 %v2104, 0.0
    %v2116 = vmax.f32 %v2106, 0.0
    %v2117 = vmax.f32 %v2108, 0.0
    %v2118 = vpack.c.bf16 %v2112, %v2110
    %v2119 = vpack.c.bf16 %v2113, %v2111
    %v2120 = vpack.c.bf16 %v2116, %v2114
    %v2121 = vpack.c.bf16 %v2117, %v2115
    %v2122 = vld [vmem:[#allocation19] sm:$0xf]
    %v2123 = vld [vmem:[#allocation19 + $0x4] sm:$0xf]
    %v2124 = vld [vmem:[#allocation19 + $0x8] sm:$0xf]
    %v2125 = vld [vmem:[#allocation19 + $0xc] sm:$0xf]
    %v2126 = vld [vmem:[#allocation19 + $0x10] sm:$0xf]
    %v2127 = vld [vmem:[#allocation19 + $0x14] sm:$0xf]
    %v2128 = vld [vmem:[#allocation19 + $0x18] sm:$0xf]
    %v2129 = vld [vmem:[#allocation19 + $0x1c] sm:$0xf]
    %v2130 = vld [vmem:[#allocation19 + $0x20] sm:$0xf]
    %v2131 = vld [vmem:[#allocation19 + $0x24] sm:$0xf]
    %v2132 = vld [vmem:[#allocation19 + $0x28] sm:$0xf]
    %v2133 = vld [vmem:[#allocation19 + $0x2c] sm:$0xf]
    %v2134 = vld [vmem:[#allocation19 + $0x30] sm:$0xf]
    %v2135 = vld [vmem:[#allocation19 + $0x34] sm:$0xf]
    %v2136 = vld [vmem:[#allocation19 + $0x38] sm:$0xf]
    %v2137 = vld [vmem:[#allocation19 + $0x3c] sm:$0xf]
    %v2138 = vld [vmem:[#allocation19 + $0x40] sm:$0xf]
    %v2139 = vld [vmem:[#allocation19 + $0x44] sm:$0xf]
    %v2140 = vld [vmem:[#allocation19 + $0x48] sm:$0xf]
    %v2141 = vld [vmem:[#allocation19 + $0x4c] sm:$0xf]
    %v2142 = vld [vmem:[#allocation19 + $0x50] sm:$0xf]
    %v2143 = vld [vmem:[#allocation19 + $0x54] sm:$0xf]
    %v2144 = vld [vmem:[#allocation19 + $0x58] sm:$0xf]
    %v2145 = vld [vmem:[#allocation19 + $0x5c] sm:$0xf]
    %v2146 = vld [vmem:[#allocation19 + $0x60] sm:$0xf]
    %v2147 = vld [vmem:[#allocation19 + $0x64] sm:$0xf]
    %v2148 = vld [vmem:[#allocation19 + $0x68] sm:$0xf]
    %v2149 = vld [vmem:[#allocation19 + $0x6c] sm:$0xf]
    %v2150 = vld [vmem:[#allocation19 + $0x70] sm:$0xf]
    %v2151 = vld [vmem:[#allocation19 + $0x74] sm:$0xf]
    %v2152 = vld [vmem:[#allocation19 + $0x78] sm:$0xf]
    %v2153 = vld [vmem:[#allocation19 + $0x7c] sm:$0xf]
    %v2186 = vunpack.c.l.b16 %v2122
    %v2187 = vunpack.c.l.b16 %v2123
    %v2188 = vunpack.c.l.b16 %v2124
    %v2189 = vunpack.c.l.b16 %v2125
    %v2190 = vunpack.c.l.b16 %v2126
    %v2191 = vunpack.c.l.b16 %v2127
    %v2192 = vunpack.c.l.b16 %v2128
    %v2193 = vunpack.c.l.b16 %v2129
    %v2194 = vunpack.c.l.b16 %v2130
    %v2195 = vunpack.c.l.b16 %v2131
    %v2196 = vunpack.c.l.b16 %v2132
    %v2197 = vunpack.c.l.b16 %v2133
    %v2198 = vunpack.c.l.b16 %v2134
    %v2199 = vunpack.c.l.b16 %v2135
    %v2200 = vunpack.c.l.b16 %v2136
    %v2201 = vunpack.c.l.b16 %v2137
    %v2202 = vunpack.c.l.b16 %v2138
    %v2203 = vunpack.c.l.b16 %v2139
    %v2204 = vunpack.c.l.b16 %v2140
    %v2205 = vunpack.c.l.b16 %v2141
    %v2206 = vunpack.c.l.b16 %v2142
    %v2207 = vunpack.c.l.b16 %v2143
    %v2208 = vunpack.c.l.b16 %v2144
    %v2209 = vunpack.c.l.b16 %v2145
    %v2210 = vunpack.c.l.b16 %v2146
    %v2211 = vunpack.c.l.b16 %v2147
    %v2212 = vunpack.c.l.b16 %v2148
    %v2213 = vunpack.c.l.b16 %v2149
    %v2214 = vunpack.c.l.b16 %v2150
    %v2215 = vunpack.c.l.b16 %v2151
    %v2216 = vunpack.c.l.b16 %v2152
    %v2217 = vunpack.c.l.b16 %v2153
    %v2218 = vpack.c.b16 %v2187, %v2186
    %v2219 = vpack.c.b16 %v2189, %v2188
    %v2220 = vpack.c.b16 %v2191, %v2190
    %v2221 = vpack.c.b16 %v2193, %v2192
    %v2222 = vpack.c.b16 %v2195, %v2194
    %v2223 = vpack.c.b16 %v2197, %v2196
    %v2224 = vpack.c.b16 %v2199, %v2198
    %v2225 = vpack.c.b16 %v2201, %v2200
    %v2226 = vpack.c.b16 %v2203, %v2202
    %v2227 = vpack.c.b16 %v2205, %v2204
    %v2228 = vpack.c.b16 %v2207, %v2206
    %v2229 = vpack.c.b16 %v2209, %v2208
    %v2230 = vpack.c.b16 %v2211, %v2210
    %v2231 = vpack.c.b16 %v2213, %v2212
    %v2232 = vpack.c.b16 %v2215, %v2214
    %v2233 = vpack.c.b16 %v2217, %v2216
    %2250 = vmatprep.subr.bf16.mxu0 0
    %2251 = vmatpush1.bf16.msra.mxu0 %v2218
    %2252 = vmatprep.subr.bf16.mxu0 0
    %2253 = vmatpush1.bf16.msra.mxu0 %v2219
    %2254 = vmatprep.subr.bf16.mxu0 0
    %2255 = vmatpush1.bf16.msra.mxu0 %v2220
    %2256 = vmatprep.subr.bf16.mxu0 0
    %2257 = vmatpush1.bf16.msra.mxu0 %v2221
    %2258 = vmatprep.subr.bf16.mxu0 0
    %2259 = vmatpush1.bf16.msra.mxu0 %v2222
    %2260 = vmatprep.subr.bf16.mxu0 0
    %2261 = vmatpush1.bf16.msra.mxu0 %v2223
    %2262 = vmatprep.subr.bf16.mxu0 0
    %2263 = vmatpush1.bf16.msra.mxu0 %v2224
    %2264 = vmatprep.subr.bf16.mxu0 0
    %2265 = vmatpush1.bf16.msra.mxu0 %v2225
    %2266 = vmatprep.subr.bf16.mxu0 0
    %2267 = vmatpush1.bf16.msra.mxu0 %v2226
    %2268 = vmatprep.subr.bf16.mxu0 0
    %2269 = vmatpush1.bf16.msra.mxu0 %v2227
    %2270 = vmatprep.subr.bf16.mxu0 0
    %2271 = vmatpush1.bf16.msra.mxu0 %v2228
    %2272 = vmatprep.subr.bf16.mxu0 0
    %2273 = vmatpush1.bf16.msra.mxu0 %v2229
    %2274 = vmatprep.subr.bf16.mxu0 0
    %2275 = vmatpush1.bf16.msra.mxu0 %v2230
    %2276 = vmatprep.subr.bf16.mxu0 0
    %2277 = vmatpush1.bf16.msra.mxu0 %v2231
    %2278 = vmatprep.subr.bf16.mxu0 0
    %2279 = vmatpush1.bf16.msra.mxu0 %v2232
    %2280 = vmatprep.subr.bf16.mxu0 0
    %2281 = vmatpush1.bf16.msra.mxu0 %v2233
    %2282 = vmatprep.mubr.bf16.mxu0 %v2119
    %2283 = vmatmul.mubr.bf16.gmra.mrb[0].mxu0 %v2118
    %v2284 = vpop.f32.mrb[0].mxu0
    %v2285 = vadd.f32 0.0, %v2284
    %v2286 = vpop.f32.mrb[0].mxu0
    %v2287 = vpop.f32.mrb[0].mxu0
    %v2288 = vadd.f32 0.0, %v2287
    %v2289 = vpop.f32.mrb[0].mxu0
    %2290 = vmatprep.mubr.bf16.mxu0 %v2121
    %2291 = vmatmul.mubr.bf16.gmra.mrb[0].mxu0 %v2120
    %v2292 = vpop.f32.mrb[0].mxu0
    %v2293 = vadd.f32 0.0, %v2292
    %v2294 = vpop.f32.mrb[0].mxu0
    %v2295 = vpop.f32.mrb[0].mxu0
    %v2296 = vadd.f32 0.0, %v2295
    %v2297 = vpop.f32.mrb[0].mxu0
    %2298 = vdwg.mxu0
    %v2299 = vld [vmem:[#allocation20] sm:$0x1]
    %v2300 = vld [vmem:[#allocation22] sm:$0x1]
    %v2301 = vpack.c.bf16 %v2288, %v2285
    %v2302 = vpack.c.bf16 %v2296, %v2293
    %2303 = vmatprep.subr.bf16.mxu0 0
    %2304 = vmatpush1.bf16.msra.mxu0 %v1646
    %2305 = vmatprep.subr.bf16.mxu0 0
    %2306 = vmatpush1.bf16.msra.mxu0 %v1647
    %2307 = vmatprep.subr.bf16.mxu0 0
    %2308 = vmatpush1.bf16.msra.mxu0 %v1648
    %2309 = vmatprep.subr.bf16.mxu0 0
    %2310 = vmatpush1.bf16.msra.mxu0 %v1649
    %2311 = vmatprep.subr.bf16.mxu0 0
    %2312 = vmatpush1.bf16.msra.mxu0 %v1650
    %2313 = vmatprep.subr.bf16.mxu0 0
    %2314 = vmatpush1.bf16.msra.mxu0 %v1651
    %2315 = vmatprep.subr.bf16.mxu0 0
    %2316 = vmatpush1.bf16.msra.mxu0 %v1652
    %2317 = vmatprep.subr.bf16.mxu0 0
    %2318 = vmatpush1.bf16.msra.mxu0 %v1653
    %2319 = vmatprep.subr.bf16.mxu0 0
    %2320 = vmatpush1.bf16.msra.mxu0 0
    %2321 = vmatprep.subr.bf16.mxu0 0
    %2322 = vmatpush1.bf16.msra.mxu0 0
    %2323 = vmatprep.subr.bf16.mxu0 0
    %2324 = vmatpush1.bf16.msra.mxu0 0
    %2325 = vmatprep.subr.bf16.mxu0 0
    %2326 = vmatpush1.bf16.msra.mxu0 0
    %2327 = vmatprep.subr.bf16.mxu0 0
    %2328 = vmatpush1.bf16.msra.mxu0 0
    %2329 = vmatprep.subr.bf16.mxu0 0
    %2330 = vmatpush1.bf16.msra.mxu0 0
    %2331 = vmatprep.subr.bf16.mxu0 0
    %2332 = vmatpush1.bf16.msra.mxu0 0
    %2333 = vmatprep.subr.bf16.mxu0 0
    %2334 = vmatpush1.bf16.msra.mxu0 0
    %2335 = vmatprep.mubr.bf16.mxu0 0
    %2336 = vmatmul.mubr.bf16.gmra.mrb[0].mxu0 %v2301
    %v2337 = vpop.f32.mrb[0].mxu0
    %v2338 = vadd.f32 0.0, %v2337
    %v2339 = vpop.f32.mrb[0].mxu0
    %v2340 = vpop.f32.mrb[0].mxu0
    %v2341 = vadd.f32 0.0, %v2340
    %v2342 = vpop.f32.mrb[0].mxu0
    %2343 = vmatprep.mubr.bf16.mxu0 0
    %2344 = vmatmul.mubr.bf16.gmra.mrb[0].mxu0 %v2302
    %v2345 = vpop.f32.mrb[0].mxu0
    %v2346 = vadd.f32 0.0, %v2345
    %v2347 = vpop.f32.mrb[0].mxu0
    %v2348 = vpop.f32.mrb[0].mxu0
    %v2349 = vadd.f32 0.0, %v2348
    %v2350 = vpop.f32.mrb[0].mxu0
    %2351 = vdwg.mxu0
    %v2352 = vmul.f32 %v2338, 0.015625
    %v2353 = vmul.f32 %v2341, 0.015625
    %v2354 = vmul.f32 %v2346, 0.015625
    %v2355 = vmul.f32 %v2349, 0.015625
    %v2356 = vsub.f32 %v2285, %v2352
    %v2357 = vsub.f32 %v2288, %v2353
    %v2358 = vsub.f32 %v2293, %v2354
    %v2359 = vsub.f32 %v2296, %v2355
    %v2360 = vmul.f32 %v2356, %v2356
    %v2361 = vmul.f32 %v2357, %v2357
    %v2362 = vmul.f32 %v2358, %v2358
    %v2363 = vmul.f32 %v2359, %v2359
    %v2364 = vpack.c.bf16 %v2361, %v2360
    %v2365 = vpack.c.bf16 %v2363, %v2362
    %2366 = vmatprep.subr.bf16.mxu0 0
    %2367 = vmatpush1.bf16.msra.mxu0 %v1646
    %2368 = vmatprep.subr.bf16.mxu0 0
    %2369 = vmatpush1.bf16.msra.mxu0 %v1647
    %2370 = vmatprep.subr.bf16.mxu0 0
    %2371 = vmatpush1.bf16.msra.mxu0 %v1648
    %2372 = vmatprep.subr.bf16.mxu0 0
    %2373 = vmatpush1.bf16.msra.mxu0 %v1649
    %2374 = vmatprep.subr.bf16.mxu0 0
    %2375 = vmatpush1.bf16.msra.mxu0 %v1650
    %2376 = vmatprep.subr.bf16.mxu0 0
    %2377 = vmatpush1.bf16.msra.mxu0 %v1651
    %2378 = vmatprep.subr.bf16.mxu0 0
    %2379 = vmatpush1.bf16.msra.mxu0 %v1652
    %2380 = vmatprep.subr.bf16.mxu0 0
    %2381 = vmatpush1.bf16.msra.mxu0 %v1653
    %2382 = vmatprep.subr.bf16.mxu0 0
    %2383 = vmatpush1.bf16.msra.mxu0 0
    %2384 = vmatprep.subr.bf16.mxu0 0
    %2385 = vmatpush1.bf16.msra.mxu0 0
    %2386 = vmatprep.subr.bf16.mxu0 0
    %2387 = vmatpush1.bf16.msra.mxu0 0
    %2388 = vmatprep.subr.bf16.mxu0 0
    %2389 = vmatpush1.bf16.msra.mxu0 0
    %2390 = vmatprep.subr.bf16.mxu0 0
    %2391 = vmatpush1.bf16.msra.mxu0 0
    %2392 = vmatprep.subr.bf16.mxu0 0
    %2393 = vmatpush1.bf16.msra.mxu0 0
    %2394 = vmatprep.subr.bf16.mxu0 0
    %2395 = vmatpush1.bf16.msra.mxu0 0
    %2396 = vmatprep.subr.bf16.mxu0 0
    %2397 = vmatpush1.bf16.msra.mxu0 0
    %2398 = vmatprep.mubr.bf16.mxu0 0
    %2399 = vmatmul.mubr.bf16.gmra.mrb[0].mxu0 %v2364
    %v2400 = vpop.f32.mrb[0].mxu0
    %v2401 = vadd.f32 0.0, %v2400
    %v2402 = vpop.f32.mrb[0].mxu0
    %v2403 = vpop.f32.mrb[0].mxu0
    %v2404 = vadd.f32 0.0, %v2403
    %v2405 = vpop.f32.mrb[0].mxu0
    %2406 = vmatprep.mubr.bf16.mxu0 0
    %2407 = vmatmul.mubr.bf16.gmra.mrb[0].mxu0 %v2365
    %v2408 = vpop.f32.mrb[0].mxu0
    %v2409 = vadd.f32 0.0, %v2408
    %v2410 = vpop.f32.mrb[0].mxu0
    %v2411 = vpop.f32.mrb[0].mxu0
    %v2412 = vadd.f32 0.0, %v2411
    %v2413 = vpop.f32.mrb[0].mxu0
    %2414 = vdwg.mxu0
    %v2415 = vmul.f32 %v2401, 0.015625
    %v2416 = vmul.f32 %v2404, 0.015625
    %v2417 = vmul.f32 %v2409, 0.015625
    %v2418 = vmul.f32 %v2412, 0.015625
    %v2419 = vadd.f32 %v2415, 1e-05
    %v2420 = vadd.f32 %v2416, 1e-05
    %v2421 = vadd.f32 %v2417, 1e-05
    %v2422 = vadd.f32 %v2418, 1e-05
    %v2423 = vrsqrt.pop %v2419
    %v2424 = vrsqrt.pop %v2420
    %v2425 = vrsqrt.pop %v2421
    %v2426 = vrsqrt.pop %v2422
    %v2427 = vmul.f32 %v2356, %v2423
    %v2428 = vmul.f32 %v2357, %v2424
    %v2429 = vmul.f32 %v2358, %v2425
    %v2430 = vmul.f32 %v2359, %v2426
    %v2432 = vlaneseq
    %v2433 = vshrl.u32 %v2432, 7
    %v2434 = vsub.s32 0, %v2433
    %v2435 = vrot.slane %v2299, %v2434
    %v2437 = vmul.f32 %v2427, %v2435
    %v2438 = vmul.f32 %v2428, %v2435
    %v2439 = vmul.f32 %v2429, %v2435
    %v2440 = vmul.f32 %v2430, %v2435
    %v2442 = vlaneseq
    %v2443 = vshrl.u32 %v2442, 7
    %v2444 = vsub.s32 0, %v2443
    %v2445 = vrot.slane %v2300, %v2444
    %v2447 = vadd.f32 %v2437, %v2445
    %v2448 = vadd.f32 %v2438, %v2445
    %v2449 = vadd.f32 %v2439, %v2445
    %v2450 = vadd.f32 %v2440, %v2445
    %v2451 = vadd.f32 %v214, %v2447
    %v2452 = vadd.f32 %v215, %v2448
    %v2453 = vadd.f32 %v216, %v2449
    %v2454 = vadd.f32 %v217, %v2450
    %2455 = vst [vmem:[#allocation23] sm:$0xff] %v2451
    %2456 = vst [vmem:[#allocation23 + $0x8] sm:$0xff] %v2452
    %2457 = vst [vmem:[#allocation23 + $0x10] sm:$0xff] %v2453
    %2458 = vst [vmem:[#allocation23 + $0x18] sm:$0xff] %v2454
    // Predicated region
    $region106: #{tpu_custom_call.1} parent=1 // pred_check
      _
    $region107: #{tpu_custom_call.1} parent=1 // pred_check_branch
      %2460 = sbr.rel (0) target = $region109
    $region108: #{tpu_custom_call.1} parent=1 // pred_region
      %s2462 = ssub.s32 512, 512
      %2463 = vsyncadd [#allocation4], %s2462
      %s2464 = sshll.u32 [#allocation23], 4
      %s2465 = int_to_ptr.vmem [resolvable:$true] %s2464
      %2470 = dma.vmem_to_hbm [thread:$0]  %s2465, 512, %s13, [#allocation4], 128, 128, 8
    $region109: #{tpu_custom_call.1} parent=1 // pred_fallthru
      _
    // Predicated region
    $region110: #{tpu_custom_call.1} parent=1 // pred_check
      _
    $region111: #{tpu_custom_call.1} parent=1 // pred_check_branch
      %2472 = sbr.rel (0) target = $region113
    $region112: #{tpu_custom_call.1} parent=1 // pred_region
      %2473 = dma.done [#allocation4], 512
    $region113: #{tpu_custom_call.1} parent=1 // pred_fallthru
      _
    %2474 = vsyncpa [#allocation3], 1
    %2475 = vsyncpa [#allocation6], 1
    %2476 = vsyncpa [#allocation9], 1
    %2477 = vsyncpa [#allocation12], 1
    %2478 = vsyncpa [#allocation15], 1
    %2479 = vsyncpa [#allocation18], 1
    %2480 = vsyncpa [#allocation21], 1
    %2481 = vsyncpa [#allocation4], 1

</llo_original>
